<compile_context>
chip_gen: v7x
topology: tpu7x:2x2x1
jax: 0.10.0
libtpu: 0.0.40
codegen_flags: <defaults>
</compile_context>

<pallas_src>
import functools

import jax
import jax.numpy as jnp
from jax.experimental import pallas as pl
from jax.experimental.pallas import tpu as pltpu

_GATE_PAD = 128         # num_layers*4 padded to one full lane group
_LANE = 128
_MAX_BATCH_TILE = 2048  # rows per grid step; footprint stays well inside the
                        # 32 MiB default scoped VMEM on v5e/v6e/v7x
_NEG_BIG = -1e30        # f32-representable "minus infinity" for masked lanes
_EXACT_GELU = False     # False: tanh-approx GELU on the EUP (fast);
                        # True : erf GELU matching PyTorch nn.GELU() exactly


def _round_up(a, m):
    return (a + m - 1) // m * m


# ----------------------------------------------------------------------------
# Kernel: the whole MLP chain (config_net -> softmax -> reflection_net ->
# sigmoid -> gating -> softmax) for one batch tile, output stored transposed.
# ----------------------------------------------------------------------------
def _adaptive_config_kernel(x_ref, w1_ref, wr_ref, b_ref, out_ref, *, l4_rows):
    """
    x_ref  : (TB, adapt_dim)              bf16
    w1_ref : (adapt_dim, 256)             bf16
    wr_ref : (256+128+128+128, 128)       bf16   rows = [w2 | w3_pad | w4_pad | w5_pad]
    b_ref  : (1, 896)                     f32    cols = [b1 | b2 | b3_masked | b4 | b5_pad | gate_mask]
    out_ref: (l4_rows, TB)                f32    transposed gates (first L4 rows valid)
    """
    x = x_ref[...]

    # Static, lane/sublane-aligned slices of the packed buffers (no extra DMAs).
    w2 = wr_ref[0:256, :]
    w3 = wr_ref[256:384, :]
    w4 = wr_ref[384:512, :]
    w5 = wr_ref[512:640, :]

    b1 = b_ref[:, 0:256]
    b2 = b_ref[:, 256:384]
    b3 = b_ref[:, 384:512]       # pad lanes pre-filled with -1e30
    b4 = b_ref[:, 512:640]
    b5 = b_ref[:, 640:768]
    gate_mask = b_ref[:, 768:896]  # 0 on valid lanes, -1e30 on pad lanes

    def linear(v, w, b):
        # MXU in bf16, accumulate in f32; elementwise math stays f32.
        return jnp.dot(v.astype(jnp.bfloat16), w,
                       preferred_element_type=jnp.float32) + b

    def gelu(v):
        return jax.nn.gelu(v, approximate=not _EXACT_GELU)

    def softmax(v):
        # Pad lanes arrive already at -1e30 (via bias packing), so
        # exp(-1e30 - m) underflows to exactly 0: no iota/where masking needed.
        m = jnp.max(v, axis=-1, keepdims=True)
        e = jnp.exp(v - m)
        denom = jnp.sum(e, axis=-1, keepdims=True)
        return e * pl.reciprocal(denom, approx=True)

    # config_net
    h = gelu(linear(x, w1_ref[...], b1))          # (TB, 256)
    h = gelu(linear(h, w2, b2))                   # (TB, 128)
    config = softmax(linear(h, w3, b3))           # (TB, 128), pad lanes == 0

    # reflection_net
    r = gelu(linear(config, w4, b4))              # (TB, 128)
    r = linear(r, w5, b5)                         # (TB, 128)
    reflection = 0.5 * (jnp.tanh(0.5 * r) + 1.0)  # sigmoid, single EUP push

    # gate + renormalize (pad lanes forced to -1e30 via gate_mask)
    adjusted = softmax(config * reflection + gate_mask)   # (TB, 128)

    # Lane-dense transposed store: only the valid gate rows go back to HBM.
    out_ref[...] = jnp.transpose(adjusted)[0:l4_rows, :].astype(out_ref.dtype)


# ----------------------------------------------------------------------------
# Wrapper
# ----------------------------------------------------------------------------
def adaptive_configuration_forward(adapt_input, params, num_layers):
    """Runs the Pallas kernel and returns the same dict as the PyTorch module."""
    B, adapt_dim = adapt_input.shape
    L4 = num_layers * 4
    L4R = _round_up(L4, 8)                    # sublane-aligned output rows
    assert L4 <= _GATE_PAD, "gate width must fit one lane group"

    (w1, b1), (w2, b2), (w3, b3), (w4, b4), (w5, b5) = params

    # --- pack weights / biases (4 input DMAs total) -------------------------
    w3p = jnp.pad(w3, ((0, 0), (0, _GATE_PAD - L4)))
    w5p = jnp.pad(w5, ((0, 0), (0, _GATE_PAD - L4)))
    w4p = jnp.pad(w4, ((0, _GATE_PAD - L4), (0, 0)))

    # Bias-based masking: pad entries of b3 carry -1e30 so the first softmax's
    # pad lanes vanish; one extra 128-wide gate-mask row does the same for the
    # second softmax.  Numerically identical to iota/where masking.
    b3m = jnp.full((_GATE_PAD,), _NEG_BIG, jnp.float32).at[:L4].set(b3)
    b5p = jnp.pad(b5, (0, _GATE_PAD - L4))
    gate_mask = jnp.full((_GATE_PAD,), _NEG_BIG, jnp.float32).at[:L4].set(0.0)

    w1_b = w1.astype(jnp.bfloat16)                                          # (adapt_dim, 256)
    w_rest = jnp.concatenate([w2, w3p, w4p, w5p], axis=0).astype(jnp.bfloat16)  # (640, 128)
    b_all = jnp.concatenate([b1, b2, b3m, b4, b5p, gate_mask]
                            ).reshape(1, -1).astype(jnp.float32)            # (1, 896)

    x = adapt_input.astype(jnp.bfloat16)

    # --- batch tiling --------------------------------------------------------
    # Pad B to a multiple of 128 so the transposed output stores stay
    # lane-dense; for mid-sized batches split into >=2 tiles so v7x's two
    # TensorCores both get work.
    B_pad = _round_up(B, _LANE)
    if B_pad <= _LANE:
        TB = B_pad
    elif B_pad <= 2 * _MAX_BATCH_TILE:
        TB = _round_up(pl.cdiv(B_pad, 2), _LANE)
        B_pad = _round_up(B_pad, TB)
    else:
        TB = _MAX_BATCH_TILE
        B_pad = _round_up(B_pad, TB)
    if B_pad != B:
        x = jnp.pad(x, ((0, B_pad - B), (0, 0)))
    grid = (B_pad // TB,)

    flops = 2 * B_pad * (adapt_dim * 256 + 256 * 128 + 3 * 128 * 128)
    transcendentals = B_pad * (256 + 128 + 128 + 128 + 2 * _GATE_PAD)
    bytes_accessed = (x.size * 2 + w1_b.size * 2 + w_rest.size * 2
                      + b_all.size * 4 + L4R * B_pad * 4)

    out_t = pl.pallas_call(
        functools.partial(_adaptive_config_kernel, l4_rows=L4R),
        out_shape=jax.ShapeDtypeStruct((L4R, B_pad), jnp.float32),
        grid=grid,
        in_specs=[
            pl.BlockSpec((TB, adapt_dim), lambda i: (i, 0)),   # x: tiled over batch
            pl.BlockSpec(w1_b.shape, lambda i: (0, 0)),        # weights: VMEM-resident
            pl.BlockSpec(w_rest.shape, lambda i: (0, 0)),
            pl.BlockSpec(b_all.shape, lambda i: (0, 0)),
        ],
        out_specs=pl.BlockSpec((L4R, TB), lambda i: (0, i)),   # transposed, lane-dense
        compiler_params=pltpu.CompilerParams(
            dimension_semantics=("parallel",)),
        cost_estimate=pl.CostEstimate(
            flops=flops,
            transcendentals=transcendentals,
            bytes_accessed=bytes_accessed),
    )(x, w1_b, w_rest, b_all)

    # (L4R, B_pad) -> (num_layers, 4, B); only cheap leading-axis indexing,
    # no extra transpose pass over HBM.
    per_gate = out_t[:L4, :B].reshape(num_layers, 4, B)
    names = ("moe_weight", "token_mixer_weight", "channel_mixer_weight",
             "attention_weight")
    config_dict = {}
    for layer in range(num_layers):
        for gi, name in enumerate(names):
            config_dict[f"layer_{layer + 1}_{name}"] = per_gate[layer, gi]
    return config_dict


# ----------------------------------------------------------------------------
# Deterministic parameter init (xavier-uniform weights, zero biases),
# mirroring initialize_weights() in the PyTorch module.  Weights are stored
# as [in, out] so the kernel computes x @ W (== x @ W_pt.T in PyTorch).
# ----------------------------------------------------------------------------
def _xavier_uniform(key, fan_in, fan_out):
    bound = jnp.sqrt(6.0 / (fan_in + fan_out))
    return jax.random.uniform(
        key, (fan_in, fan_out), dtype=jnp.float32, minval=-bound, maxval=bound
    )


def init_params(key, adapt_dim, num_layers):
    L4 = num_layers * 4
    dims = [
        (adapt_dim, 256),  # config_net.0
        (256, 128),        # config_net.2
        (128, L4),         # config_net.4
        (L4, 128),         # reflection_net.0
        (128, L4),         # reflection_net.2
    ]
    keys = jax.random.split(key, len(dims))
    params = []
    for k, (fin, fout) in zip(keys, dims):
        w = _xavier_uniform(k, fin, fout)
        b = jnp.zeros((fout,), dtype=jnp.float32)
        params.append((w, b))
    return params


if __name__ == "__main__":
    adapt_dim = 32
    num_layers = 4
    batch = 2

    key = jax.random.PRNGKey(0)
    k_params, k_x = jax.random.split(key)

    params = init_params(k_params, adapt_dim, num_layers)
    x = jax.random.normal(k_x, (batch, adapt_dim), dtype=jnp.float32)

    fwd = jax.jit(
        functools.partial(adaptive_configuration_forward, num_layers=num_layers)
    )
    out = fwd(x, params)
    out = jax.block_until_ready(out)

    # Sanity: renormalized gates sum to ~1 per batch element (loose tolerance:
    # bf16 matmuls + approx reciprocal introduce ~1e-3-level deviations).
    total = sum(out[k] for k in out)
    assert total.shape == (batch,)
    assert jnp.allclose(total, jnp.ones((batch,)), atol=1e-2)

    print("KERNEL_OK")
</pallas_src>

<mosaic_0001>
module attributes {stable_mosaic.version = 11 : i64} {
  func.func @_adaptive_config_kernel(%arg0: i32, %arg1: memref<128x32xbf16, #tpu.memory_space<vmem>>, %arg2: memref<32x256xbf16, #tpu.memory_space<vmem>>, %arg3: memref<640x128xbf16, #tpu.memory_space<vmem>>, %arg4: memref<1x896xf32, #tpu.memory_space<vmem>>, %arg5: memref<16x128xf32, #tpu.memory_space<vmem>>) attributes {dimension_semantics = [#tpu.dimension_semantics<parallel>], iteration_bounds = array<i64: 1>, scalar_prefetch = 0 : i64, scratch_operands = 0 : i64, tpu.core_type = #tpu.core_type<tc>, window_params = [{transform_indices = @transform_0, window_bounds = array<i64: 128, 32>}, {pipeline_mode = #tpu.pipeline_mode<synchronous>, transform_indices = @transform_1, window_bounds = array<i64: 32, 256>}, {pipeline_mode = #tpu.pipeline_mode<synchronous>, transform_indices = @transform_2, window_bounds = array<i64: 640, 128>}, {pipeline_mode = #tpu.pipeline_mode<synchronous>, transform_indices = @transform_3, window_bounds = array<i64: 1, 896>}, {transform_indices = @transform_4, window_bounds = array<i64: 16, 128>}]} {
    %c0 = arith.constant 0 : index
    %c0_0 = arith.constant 0 : index
    %0 = vector.load %arg1[%c0, %c0_0] : memref<128x32xbf16, #tpu.memory_space<vmem>>, vector<128x32xbf16>
    %c0_1 = arith.constant 0 : index
    %c0_2 = arith.constant 0 : index
    %1 = vector.load %arg3[%c0_1, %c0_2] : memref<640x128xbf16, #tpu.memory_space<vmem>>, vector<256x128xbf16>
    %c256 = arith.constant 256 : index
    %c0_3 = arith.constant 0 : index
    %2 = vector.load %arg3[%c256, %c0_3] : memref<640x128xbf16, #tpu.memory_space<vmem>>, vector<128x128xbf16>
    %c384 = arith.constant 384 : index
    %c0_4 = arith.constant 0 : index
    %3 = vector.load %arg3[%c384, %c0_4] : memref<640x128xbf16, #tpu.memory_space<vmem>>, vector<128x128xbf16>
    %c512 = arith.constant 512 : index
    %c0_5 = arith.constant 0 : index
    %4 = vector.load %arg3[%c512, %c0_5] : memref<640x128xbf16, #tpu.memory_space<vmem>>, vector<128x128xbf16>
    %c0_6 = arith.constant 0 : index
    %c0_7 = arith.constant 0 : index
    %5 = vector.load %arg4[%c0_6, %c0_7] : memref<1x896xf32, #tpu.memory_space<vmem>>, vector<1x256xf32>
    %c0_8 = arith.constant 0 : index
    %c256_9 = arith.constant 256 : index
    %6 = vector.load %arg4[%c0_8, %c256_9] : memref<1x896xf32, #tpu.memory_space<vmem>>, vector<1x128xf32>
    %c0_10 = arith.constant 0 : index
    %c384_11 = arith.constant 384 : index
    %7 = vector.load %arg4[%c0_10, %c384_11] : memref<1x896xf32, #tpu.memory_space<vmem>>, vector<1x128xf32>
    %c0_12 = arith.constant 0 : index
    %c512_13 = arith.constant 512 : index
    %8 = vector.load %arg4[%c0_12, %c512_13] : memref<1x896xf32, #tpu.memory_space<vmem>>, vector<1x128xf32>
    %c0_14 = arith.constant 0 : index
    %c640 = arith.constant 640 : index
    %9 = vector.load %arg4[%c0_14, %c640] : memref<1x896xf32, #tpu.memory_space<vmem>>, vector<1x128xf32>
    %c0_15 = arith.constant 0 : index
    %c768 = arith.constant 768 : index
    %10 = vector.load %arg4[%c0_15, %c768] : memref<1x896xf32, #tpu.memory_space<vmem>>, vector<1x128xf32>
    %c0_16 = arith.constant 0 : index
    %c0_17 = arith.constant 0 : index
    %11 = vector.load %arg2[%c0_16, %c0_17] : memref<32x256xbf16, #tpu.memory_space<vmem>>, vector<32x256xbf16>
    %cst = arith.constant dense<0.000000e+00> : vector<128x256xf32>
    %12 = tpu.matmul %0, %11, %cst {dimension_numbers = #tpu.dot_dimension_numbers<[1], [0], [0], [1], [0, 0, 1, 1], [], []>} : vector<128x32xbf16>, vector<32x256xbf16>, vector<128x256xf32> -> vector<128x256xf32>
    %13 = vector.broadcast %5 : vector<1x256xf32> to vector<128x256xf32>
    %14 = arith.addf %12, %13 : vector<128x256xf32>
    %15 = arith.mulf %14, %14 : vector<128x256xf32>
    %16 = arith.mulf %14, %15 : vector<128x256xf32>
    %cst_18 = arith.constant 4.471500e-02 : f32
    %17 = vector.broadcast %cst_18 : f32 to vector<128x256xf32>
    %18 = arith.mulf %17, %16 : vector<128x256xf32>
    %19 = arith.addf %14, %18 : vector<128x256xf32>
    %cst_19 = arith.constant 0.797884583 : f32
    %20 = vector.broadcast %cst_19 : f32 to vector<128x256xf32>
    %21 = arith.mulf %20, %19 : vector<128x256xf32>
    %22 = math.tanh %21 : vector<128x256xf32>
    %cst_20 = arith.constant 1.000000e+00 : f32
    %23 = vector.broadcast %cst_20 : f32 to vector<128x256xf32>
    %24 = arith.addf %23, %22 : vector<128x256xf32>
    %cst_21 = arith.constant 5.000000e-01 : f32
    %25 = vector.broadcast %cst_21 : f32 to vector<128x256xf32>
    %26 = arith.mulf %25, %24 : vector<128x256xf32>
    %27 = arith.mulf %14, %26 : vector<128x256xf32>
    %28 = arith.truncf %27 : vector<128x256xf32> to vector<128x256xbf16>
    %cst_22 = arith.constant dense<0.000000e+00> : vector<128x128xf32>
    %29 = tpu.matmul %28, %1, %cst_22 {dimension_numbers = #tpu.dot_dimension_numbers<[1], [0], [0], [1], [0, 0, 1, 1], [], []>} : vector<128x256xbf16>, vector<256x128xbf16>, vector<128x128xf32> -> vector<128x128xf32>
    %30 = vector.broadcast %6 : vector<1x128xf32> to vector<128x128xf32>
    %31 = arith.addf %29, %30 : vector<128x128xf32>
    %32 = arith.mulf %31, %31 : vector<128x128xf32>
    %33 = arith.mulf %31, %32 : vector<128x128xf32>
    %cst_23 = arith.constant 4.471500e-02 : f32
    %34 = vector.broadcast %cst_23 : f32 to vector<128x128xf32>
    %35 = arith.mulf %34, %33 : vector<128x128xf32>
    %36 = arith.addf %31, %35 : vector<128x128xf32>
    %cst_24 = arith.constant 0.797884583 : f32
    %37 = vector.broadcast %cst_24 : f32 to vector<128x128xf32>
    %38 = arith.mulf %37, %36 : vector<128x128xf32>
    %39 = math.tanh %38 : vector<128x128xf32>
    %cst_25 = arith.constant 1.000000e+00 : f32
    %40 = vector.broadcast %cst_25 : f32 to vector<128x128xf32>
    %41 = arith.addf %40, %39 : vector<128x128xf32>
    %cst_26 = arith.constant 5.000000e-01 : f32
    %42 = vector.broadcast %cst_26 : f32 to vector<128x128xf32>
    %43 = arith.mulf %42, %41 : vector<128x128xf32>
    %44 = arith.mulf %31, %43 : vector<128x128xf32>
    %45 = arith.truncf %44 : vector<128x128xf32> to vector<128x128xbf16>
    %cst_27 = arith.constant dense<0.000000e+00> : vector<128x128xf32>
    %46 = tpu.matmul %45, %2, %cst_27 {dimension_numbers = #tpu.dot_dimension_numbers<[1], [0], [0], [1], [0, 0, 1, 1], [], []>} : vector<128x128xbf16>, vector<128x128xbf16>, vector<128x128xf32> -> vector<128x128xf32>
    %47 = vector.broadcast %7 : vector<1x128xf32> to vector<128x128xf32>
    %48 = arith.addf %46, %47 : vector<128x128xf32>
    %cst_28 = arith.constant dense<0xFF800000> : vector<128xf32>
    %49 = vector.multi_reduction <maximumf>, %48, %cst_28 [1] : vector<128x128xf32> to vector<128xf32>
    %50 = vector.shape_cast %49 : vector<128xf32> to vector<128x1xf32>
    %51 = vector.broadcast %50 : vector<128x1xf32> to vector<128x128xf32>
    %52 = arith.subf %48, %51 : vector<128x128xf32>
    %53 = math.exp %52 : vector<128x128xf32>
    %cst_29 = arith.constant dense<0.000000e+00> : vector<128xf32>
    %54 = vector.multi_reduction <add>, %53, %cst_29 [1] : vector<128x128xf32> to vector<128xf32>
    %55 = vector.shape_cast %54 : vector<128xf32> to vector<128x1xf32>
    %56 = tpu.reciprocal %55 {approx = true} : vector<128x1xf32> -> vector<128x1xf32>
    %57 = vector.broadcast %56 : vector<128x1xf32> to vector<128x128xf32>
    %58 = arith.mulf %53, %57 : vector<128x128xf32>
    %59 = arith.truncf %58 : vector<128x128xf32> to vector<128x128xbf16>
    %cst_30 = arith.constant dense<0.000000e+00> : vector<128x128xf32>
    %60 = tpu.matmul %59, %3, %cst_30 {dimension_numbers = #tpu.dot_dimension_numbers<[1], [0], [0], [1], [0, 0, 1, 1], [], []>} : vector<128x128xbf16>, vector<128x128xbf16>, vector<128x128xf32> -> vector<128x128xf32>
    %61 = vector.broadcast %8 : vector<1x128xf32> to vector<128x128xf32>
    %62 = arith.addf %60, %61 : vector<128x128xf32>
    %63 = arith.mulf %62, %62 : vector<128x128xf32>
    %64 = arith.mulf %62, %63 : vector<128x128xf32>
    %cst_31 = arith.constant 4.471500e-02 : f32
    %65 = vector.broadcast %cst_31 : f32 to vector<128x128xf32>
    %66 = arith.mulf %65, %64 : vector<128x128xf32>
    %67 = arith.addf %62, %66 : vector<128x128xf32>
    %cst_32 = arith.constant 0.797884583 : f32
    %68 = vector.broadcast %cst_32 : f32 to vector<128x128xf32>
    %69 = arith.mulf %68, %67 : vector<128x128xf32>
    %70 = math.tanh %69 : vector<128x128xf32>
    %cst_33 = arith.constant 1.000000e+00 : f32
    %71 = vector.broadcast %cst_33 : f32 to vector<128x128xf32>
    %72 = arith.addf %71, %70 : vector<128x128xf32>
    %cst_34 = arith.constant 5.000000e-01 : f32
    %73 = vector.broadcast %cst_34 : f32 to vector<128x128xf32>
    %74 = arith.mulf %73, %72 : vector<128x128xf32>
    %75 = arith.mulf %62, %74 : vector<128x128xf32>
    %76 = arith.truncf %75 : vector<128x128xf32> to vector<128x128xbf16>
    %cst_35 = arith.constant dense<0.000000e+00> : vector<128x128xf32>
    %77 = tpu.matmul %76, %4, %cst_35 {dimension_numbers = #tpu.dot_dimension_numbers<[1], [0], [0], [1], [0, 0, 1, 1], [], []>} : vector<128x128xbf16>, vector<128x128xbf16>, vector<128x128xf32> -> vector<128x128xf32>
    %78 = vector.broadcast %9 : vector<1x128xf32> to vector<128x128xf32>
    %79 = arith.addf %77, %78 : vector<128x128xf32>
    %cst_36 = arith.constant 5.000000e-01 : f32
    %80 = vector.broadcast %cst_36 : f32 to vector<128x128xf32>
    %81 = arith.mulf %80, %79 : vector<128x128xf32>
    %82 = math.tanh %81 : vector<128x128xf32>
    %cst_37 = arith.constant 1.000000e+00 : f32
    %83 = vector.broadcast %cst_37 : f32 to vector<128x128xf32>
    %84 = arith.addf %82, %83 : vector<128x128xf32>
    %cst_38 = arith.constant 5.000000e-01 : f32
    %85 = vector.broadcast %cst_38 : f32 to vector<128x128xf32>
    %86 = arith.mulf %85, %84 : vector<128x128xf32>
    %87 = arith.mulf %58, %86 : vector<128x128xf32>
    %88 = vector.broadcast %10 : vector<1x128xf32> to vector<128x128xf32>
    %89 = arith.addf %87, %88 : vector<128x128xf32>
    %cst_39 = arith.constant dense<0xFF800000> : vector<128xf32>
    %90 = vector.multi_reduction <maximumf>, %89, %cst_39 [1] : vector<128x128xf32> to vector<128xf32>
    %91 = vector.shape_cast %90 : vector<128xf32> to vector<128x1xf32>
    %92 = vector.broadcast %91 : vector<128x1xf32> to vector<128x128xf32>
    %93 = arith.subf %89, %92 : vector<128x128xf32>
    %94 = math.exp %93 : vector<128x128xf32>
    %cst_40 = arith.constant dense<0.000000e+00> : vector<128xf32>
    %95 = vector.multi_reduction <add>, %94, %cst_40 [1] : vector<128x128xf32> to vector<128xf32>
    %96 = vector.shape_cast %95 : vector<128xf32> to vector<128x1xf32>
    %97 = tpu.reciprocal %96 {approx = true} : vector<128x1xf32> -> vector<128x1xf32>
    %98 = vector.broadcast %97 : vector<128x1xf32> to vector<128x128xf32>
    %99 = arith.mulf %94, %98 : vector<128x128xf32>
    %100 = tpu.transpose %99, [1, 0] : vector<128x128xf32> -> vector<128x128xf32>
    %101 = vector.extract_strided_slice %100 {offsets = [0, 0], sizes = [16, 128], strides = [1, 1]} : vector<128x128xf32> to vector<16x128xf32>
    %c0_41 = arith.constant 0 : index
    %c0_42 = arith.constant 0 : index
    %102 = vector.load %arg5[%c0_41, %c0_42] : memref<16x128xf32, #tpu.memory_space<vmem>>, vector<16x128xf32>
    tpu.vector_store %arg5[%c0_41, %c0_42], %101 {strides = array<i32>} : memref<16x128xf32, #tpu.memory_space<vmem>>, vector<16x128xf32>,
    return
  }
  func.func @transform_0(%arg0: i32) -> (i32, i32) {
    %c0_i32 = arith.constant 0 : i32
    %c0_i32_0 = arith.constant 0 : i32
    return %arg0, %c0_i32 : i32, i32
  }
  func.func @transform_1(%arg0: i32) -> (i32, i32) {
    %c0_i32 = arith.constant 0 : i32
    %c0_i32_0 = arith.constant 0 : i32
    %c0_i32_1 = arith.constant 0 : i32
    return %c0_i32, %c0_i32_0 : i32, i32
  }
  func.func @transform_2(%arg0: i32) -> (i32, i32) {
    %c0_i32 = arith.constant 0 : i32
    %c0_i32_0 = arith.constant 0 : i32
    %c0_i32_1 = arith.constant 0 : i32
    return %c0_i32, %c0_i32_0 : i32, i32
  }
  func.func @transform_3(%arg0: i32) -> (i32, i32) {
    %c0_i32 = arith.constant 0 : i32
    %c0_i32_0 = arith.constant 0 : i32
    %c0_i32_1 = arith.constant 0 : i32
    return %c0_i32, %c0_i32_0 : i32, i32
  }
  func.func @transform_4(%arg0: i32) -> (i32, i32) {
    %c0_i32 = arith.constant 0 : i32
    %c0_i32_0 = arith.constant 0 : i32
    return %c0_i32, %arg0 : i32, i32
  }
}

</mosaic_0001>

<llo_original>
// kernel: custom-call
$region0: #{custom-call}
  %s0 = inlined_call_operand.vmem [shape: f32[896], index: 0, kind: output, shape index: {}]

// kernel: adaptive_configuration_forward.1
$region0: #{adaptive_configuration_forward.1}
  #allocation0 [shape = 'u32[]', space=smem, size = 0x4, offset = 0x4, fixed_abs, tag = 'smem constant byte address 0x4 - core index']
  #allocation1 [shape = 'u32[144,128]{1,0:T(1,128)}', space=vmem, size = 0x12000, scoped, tag = 'internal scratch']
  %s0 = inlined_call_operand.vmem [shape: bf16[128,32], index: 0, kind: input, shape index: {}]
  %s1 = inlined_call_operand.vmem [shape: bf16[32,256], index: 1, kind: input, shape index: {}]
  %s2 = inlined_call_operand.vmem [shape: bf16[640,128], index: 2, kind: input, shape index: {}]
  %s3 = inlined_call_operand.vmem [shape: f32[1,896], index: 3, kind: input, shape index: {}]
  %s4 = inlined_call_operand.vmem [shape: f32[16,128], index: 4, kind: output, shape index: {}]
  %s5 = sld [smem:[#allocation0]]
  $region26: #{adaptive_configuration_forward.1} parent=0
    _
  %s7 = ssub.s32 1, %s5
  %s8 = scalar_select 0, %s7, %s5
  // Predicated region
  $region2: #{adaptive_configuration_forward.1} parent=0 // pred_check
    _
  $region3: #{adaptive_configuration_forward.1} parent=0 // pred_check_branch
    %10 = sbr.rel (0) target = $region5
  $region4: #{adaptive_configuration_forward.1} parent=0 // pred_region
    _
  $region5: #{adaptive_configuration_forward.1} parent=0 // pred_fallthru
    _
  // Predicated region
  $region6: #{adaptive_configuration_forward.1} parent=0 // pred_check
    _
  $region7: #{adaptive_configuration_forward.1} parent=0 // pred_check_branch
    %12 = sbr.rel (0) target = $region9
  $region8: #{adaptive_configuration_forward.1} parent=0 // pred_region
    _
  $region9: #{adaptive_configuration_forward.1} parent=0 // pred_fallthru
    _
  // Predicated region
  $region10: #{adaptive_configuration_forward.1} parent=0 // pred_check
    _
  $region11: #{adaptive_configuration_forward.1} parent=0 // pred_check_branch
    %14 = sbr.rel (0) target = $region13
  $region12: #{adaptive_configuration_forward.1} parent=0 // pred_region
    _
  $region13: #{adaptive_configuration_forward.1} parent=0 // pred_fallthru
    _
  // Predicated region
  $region14: #{adaptive_configuration_forward.1} parent=0 // pred_check
    _
  $region15: #{adaptive_configuration_forward.1} parent=0 // pred_check_branch
    %16 = sbr.rel (0) target = $region17
  $region16: #{adaptive_configuration_forward.1} parent=0 // pred_region
    _
  $region17: #{adaptive_configuration_forward.1} parent=0 // pred_fallthru
    _
  %v18 = vld [vmem:[%s0] sm:$0xf]
  %v19 = vld [vmem:[%s0 + $0x4] sm:$0xf]
  %v20 = vld [vmem:[%s0 + $0x8] sm:$0xf]
  %v21 = vld [vmem:[%s0 + $0xc] sm:$0xf]
  %v22 = vld [vmem:[%s0 + $0x10] sm:$0xf]
  %v23 = vld [vmem:[%s0 + $0x14] sm:$0xf]
  %v24 = vld [vmem:[%s0 + $0x18] sm:$0xf]
  %v25 = vld [vmem:[%s0 + $0x1c] sm:$0xf]
  %v26 = vld [vmem:[%s0 + $0x20] sm:$0xf]
  %v27 = vld [vmem:[%s0 + $0x24] sm:$0xf]
  %v28 = vld [vmem:[%s0 + $0x28] sm:$0xf]
  %v29 = vld [vmem:[%s0 + $0x2c] sm:$0xf]
  %v30 = vld [vmem:[%s0 + $0x30] sm:$0xf]
  %v31 = vld [vmem:[%s0 + $0x34] sm:$0xf]
  %v32 = vld [vmem:[%s0 + $0x38] sm:$0xf]
  %v33 = vld [vmem:[%s0 + $0x3c] sm:$0xf]
  %v34 = vld [vmem:[%s2] sm:$0xf]
  %v35 = vld [vmem:[%s2 + $0x4] sm:$0xf]
  %v36 = vld [vmem:[%s2 + $0x8] sm:$0xf]
  %v37 = vld [vmem:[%s2 + $0xc] sm:$0xf]
  %v38 = vld [vmem:[%s2 + $0x10] sm:$0xf]
  %v39 = vld [vmem:[%s2 + $0x14] sm:$0xf]
  %v40 = vld [vmem:[%s2 + $0x18] sm:$0xf]
  %v41 = vld [vmem:[%s2 + $0x1c] sm:$0xf]
  %v42 = vld [vmem:[%s2 + $0x20] sm:$0xf]
  %v43 = vld [vmem:[%s2 + $0x24] sm:$0xf]
  %v44 = vld [vmem:[%s2 + $0x28] sm:$0xf]
  %v45 = vld [vmem:[%s2 + $0x2c] sm:$0xf]
  %v46 = vld [vmem:[%s2 + $0x30] sm:$0xf]
  %v47 = vld [vmem:[%s2 + $0x34] sm:$0xf]
  %v48 = vld [vmem:[%s2 + $0x38] sm:$0xf]
  %v49 = vld [vmem:[%s2 + $0x3c] sm:$0xf]
  %v50 = vld [vmem:[%s2 + $0x40] sm:$0xf]
  %v51 = vld [vmem:[%s2 + $0x44] sm:$0xf]
  %v52 = vld [vmem:[%s2 + $0x48] sm:$0xf]
  %v53 = vld [vmem:[%s2 + $0x4c] sm:$0xf]
  %v54 = vld [vmem:[%s2 + $0x50] sm:$0xf]
  %v55 = vld [vmem:[%s2 + $0x54] sm:$0xf]
  %v56 = vld [vmem:[%s2 + $0x58] sm:$0xf]
  %v57 = vld [vmem:[%s2 + $0x5c] sm:$0xf]
  %v58 = vld [vmem:[%s2 + $0x60] sm:$0xf]
  %v59 = vld [vmem:[%s2 + $0x64] sm:$0xf]
  %v60 = vld [vmem:[%s2 + $0x68] sm:$0xf]
  %v61 = vld [vmem:[%s2 + $0x6c] sm:$0xf]
  %v62 = vld [vmem:[%s2 + $0x70] sm:$0xf]
  %v63 = vld [vmem:[%s2 + $0x74] sm:$0xf]
  %v64 = vld [vmem:[%s2 + $0x78] sm:$0xf]
  %v65 = vld [vmem:[%s2 + $0x7c] sm:$0xf]
  %v66 = vld [vmem:[%s2 + $0x80] sm:$0xf]
  %v67 = vld [vmem:[%s2 + $0x84] sm:$0xf]
  %v68 = vld [vmem:[%s2 + $0x88] sm:$0xf]
  %v69 = vld [vmem:[%s2 + $0x8c] sm:$0xf]
  %v70 = vld [vmem:[%s2 + $0x90] sm:$0xf]
  %v71 = vld [vmem:[%s2 + $0x94] sm:$0xf]
  %v72 = vld [vmem:[%s2 + $0x98] sm:$0xf]
  %v73 = vld [vmem:[%s2 + $0x9c] sm:$0xf]
  %v74 = vld [vmem:[%s2 + $0xa0] sm:$0xf]
  %v75 = vld [vmem:[%s2 + $0xa4] sm:$0xf]
  %v76 = vld [vmem:[%s2 + $0xa8] sm:$0xf]
  %v77 = vld [vmem:[%s2 + $0xac] sm:$0xf]
  %v78 = vld [vmem:[%s2 + $0xb0] sm:$0xf]
  %v79 = vld [vmem:[%s2 + $0xb4] sm:$0xf]
  %v80 = vld [vmem:[%s2 + $0xb8] sm:$0xf]
  %v81 = vld [vmem:[%s2 + $0xbc] sm:$0xf]
  %v82 = vld [vmem:[%s2 + $0xc0] sm:$0xf]
  %v83 = vld [vmem:[%s2 + $0xc4] sm:$0xf]
  %v84 = vld [vmem:[%s2 + $0xc8] sm:$0xf]
  %v85 = vld [vmem:[%s2 + $0xcc] sm:$0xf]
  %v86 = vld [vmem:[%s2 + $0xd0] sm:$0xf]
  %v87 = vld [vmem:[%s2 + $0xd4] sm:$0xf]
  %v88 = vld [vmem:[%s2 + $0xd8] sm:$0xf]
  %v89 = vld [vmem:[%s2 + $0xdc] sm:$0xf]
  %v90 = vld [vmem:[%s2 + $0xe0] sm:$0xf]
  %v91 = vld [vmem:[%s2 + $0xe4] sm:$0xf]
  %v92 = vld [vmem:[%s2 + $0xe8] sm:$0xf]
  %v93 = vld [vmem:[%s2 + $0xec] sm:$0xf]
  %v94 = vld [vmem:[%s2 + $0xf0] sm:$0xf]
  %v95 = vld [vmem:[%s2 + $0xf4] sm:$0xf]
  %v96 = vld [vmem:[%s2 + $0xf8] sm:$0xf]
  %v97 = vld [vmem:[%s2 + $0xfc] sm:$0xf]
  %v98 = vld [vmem:[%s2 + $0x100] sm:$0xf]
  %v99 = vld [vmem:[%s2 + $0x104] sm:$0xf]
  %v100 = vld [vmem:[%s2 + $0x108] sm:$0xf]
  %v101 = vld [vmem:[%s2 + $0x10c] sm:$0xf]
  %v102 = vld [vmem:[%s2 + $0x110] sm:$0xf]
  %v103 = vld [vmem:[%s2 + $0x114] sm:$0xf]
  %v104 = vld [vmem:[%s2 + $0x118] sm:$0xf]
  %v105 = vld [vmem:[%s2 + $0x11c] sm:$0xf]
  %v106 = vld [vmem:[%s2 + $0x120] sm:$0xf]
  %v107 = vld [vmem:[%s2 + $0x124] sm:$0xf]
  %v108 = vld [vmem:[%s2 + $0x128] sm:$0xf]
  %v109 = vld [vmem:[%s2 + $0x12c] sm:$0xf]
  %v110 = vld [vmem:[%s2 + $0x130] sm:$0xf]
  %v111 = vld [vmem:[%s2 + $0x134] sm:$0xf]
  %v112 = vld [vmem:[%s2 + $0x138] sm:$0xf]
  %v113 = vld [vmem:[%s2 + $0x13c] sm:$0xf]
  %v114 = vld [vmem:[%s3] sm:$0x3]
  %v115 = vld [vmem:[%s3 + $0x2] sm:$0x1]
  %v116 = vld [vmem:[%s3 + $0x3] sm:$0x1]
  %v117 = vld [vmem:[%s3 + $0x4] sm:$0x1]
  %v118 = vld [vmem:[%s3 + $0x5] sm:$0x1]
  %v119 = vld [vmem:[%s3 + $0x6] sm:$0x1]
  %v120 = vld [vmem:[%s1] sm:$0xff]
  %v121 = vld [vmem:[%s1 + $0x8] sm:$0xff]
  %v122 = vld [vmem:[%s1 + $0x10] sm:$0xff]
  %v123 = vld [vmem:[%s1 + $0x18] sm:$0xff]
  %v125 = vlaneseq
  %v126 = vshrl.u32 %v125, 7
  %v127 = vsub.s32 0, %v126
  %v128 = vrot.slane %v114, %v127
  %v129 = vlaneseq
  %v130 = vshrl.u32 %v129, 7
  %v131 = vsub.s32 1, %v130
  %v132 = vrot.slane %v114, %v131
  %v151 = vunpack.c.l.b16 %v18
  %v152 = vunpack.c.l.b16 %v19
  %v153 = vunpack.c.l.b16 %v20
  %v154 = vunpack.c.l.b16 %v21
  %v155 = vunpack.c.l.b16 %v22
  %v156 = vunpack.c.l.b16 %v23
  %v157 = vunpack.c.l.b16 %v24
  %v158 = vunpack.c.l.b16 %v25
  %v159 = vunpack.c.l.b16 %v26
  %v160 = vunpack.c.l.b16 %v27
  %v161 = vunpack.c.l.b16 %v28
  %v162 = vunpack.c.l.b16 %v29
  %v163 = vunpack.c.l.b16 %v30
  %v164 = vunpack.c.l.b16 %v31
  %v165 = vunpack.c.l.b16 %v32
  %v166 = vunpack.c.l.b16 %v33
  %v167 = vpack.c.b16 %v152, %v151
  %v168 = vpack.c.b16 %v154, %v153
  %v169 = vpack.c.b16 %v156, %v155
  %v170 = vpack.c.b16 %v158, %v157
  %v171 = vpack.c.b16 %v160, %v159
  %v172 = vpack.c.b16 %v162, %v161
  %v173 = vpack.c.b16 %v164, %v163
  %v174 = vpack.c.b16 %v166, %v165
  %v179 = vunpack.c.l.b16 %v120
  %v180 = vunpack.c.h.b16 %v120
  %v181 = vunpack.c.l.b16 %v121
  %v182 = vunpack.c.h.b16 %v121
  %v183 = vunpack.c.l.b16 %v122
  %v184 = vunpack.c.h.b16 %v122
  %v185 = vunpack.c.l.b16 %v123
  %v186 = vunpack.c.h.b16 %v123
  %v187 = vpack.c.b16 %v181, %v179
  %v188 = vpack.c.b16 %v182, %v180
  %v189 = vpack.c.b16 %v185, %v183
  %v190 = vpack.c.b16 %v186, %v184
  %vm195 = vcmask 261120
  %v197 = vsel %vm195, %v167, 0
  %v200 = vsel %vm195, %v168, 0
  %v203 = vsel %vm195, %v169, 0
  %v206 = vsel %vm195, %v170, 0
  %v209 = vsel %vm195, %v171, 0
  %v212 = vsel %vm195, %v172, 0
  %v215 = vsel %vm195, %v173, 0
  %v218 = vsel %vm195, %v174, 0
  %220 = vmatprep.subr.bf16.mxu0 %v188
  %221 = vmatpush1.bf16.msra.mxu0 %v187
  %222 = vmatprep.subr.bf16.mxu0 %v190
  %223 = vmatpush1.bf16.msra.mxu0 %v189
  %224 = vmatprep.subr.bf16.mxu0 0
  %225 = vmatpush1.bf16.msra.mxu0 0
  %226 = vmatprep.subr.bf16.mxu0 0
  %227 = vmatpush1.bf16.msra.mxu0 0
  %228 = vmatprep.subr.bf16.mxu0 0
  %229 = vmatpush1.bf16.msra.mxu0 0
  %230 = vmatprep.subr.bf16.mxu0 0
  %231 = vmatpush1.bf16.msra.mxu0 0
  %232 = vmatprep.subr.bf16.mxu0 0
  %233 = vmatpush1.bf16.msra.mxu0 0
  %234 = vmatprep.subr.bf16.mxu0 0
  %235 = vmatpush1.bf16.msra.mxu0 0
  %236 = vmatprep.subr.bf16.mxu0 0
  %237 = vmatpush1.bf16.msra.mxu0 0
  %238 = vmatprep.subr.bf16.mxu0 0
  %239 = vmatpush1.bf16.msra.mxu0 0
  %240 = vmatprep.subr.bf16.mxu0 0
  %241 = vmatpush1.bf16.msra.mxu0 0
  %242 = vmatprep.subr.bf16.mxu0 0
  %243 = vmatpush1.bf16.msra.mxu0 0
  %244 = vmatprep.subr.bf16.mxu0 0
  %245 = vmatpush1.bf16.msra.mxu0 0
  %246 = vmatprep.subr.bf16.mxu0 0
  %247 = vmatpush1.bf16.msra.mxu0 0
  %248 = vmatprep.subr.bf16.mxu0 0
  %249 = vmatpush1.bf16.msra.mxu0 0
  %250 = vmatprep.subr.bf16.mxu0 0
  %251 = vmatpush1.bf16.msra.mxu0 0
  %252 = vmatprep.mubr.bf16.mxu0 0
  %253 = vmatmul.mubr.bf16.gmra.mrb[0].mxu0 %v197
  %v254 = vpop.f32.mrb[0].mxu0
  %v255 = vadd.f32 %v128, %v254
  %v256 = vpop.f32.mrb[0].mxu0
  %v257 = vadd.f32 %v132, %v256
  %v258 = vpop.f32.mrb[0].mxu0
  %v259 = vadd.f32 %v128, %v258
  %v260 = vpop.f32.mrb[0].mxu0
  %v261 = vadd.f32 %v132, %v260
  %262 = vmatprep.mubr.bf16.mxu0 0
  %263 = vmatmul.mubr.bf16.gmra.mrb[0].mxu0 %v200
  %v264 = vpop.f32.mrb[0].mxu0
  %v265 = vadd.f32 %v128, %v264
  %v266 = vpop.f32.mrb[0].mxu0
  %v267 = vadd.f32 %v132, %v266
  %v268 = vpop.f32.mrb[0].mxu0
  %v269 = vadd.f32 %v128, %v268
  %v270 = vpop.f32.mrb[0].mxu0
  %v271 = vadd.f32 %v132, %v270
  %272 = vmatprep.mubr.bf16.mxu0 0
  %273 = vmatmul.mubr.bf16.gmra.mrb[0].mxu0 %v203
  %v274 = vpop.f32.mrb[0].mxu0
  %v275 = vadd.f32 %v128, %v274
  %v276 = vpop.f32.mrb[0].mxu0
  %v277 = vadd.f32 %v132, %v276
  %v278 = vpop.f32.mrb[0].mxu0
  %v279 = vadd.f32 %v128, %v278
  %v280 = vpop.f32.mrb[0].mxu0
  %v281 = vadd.f32 %v132, %v280
  %282 = vmatprep.mubr.bf16.mxu0 0
  %283 = vmatmul.mubr.bf16.gmra.mrb[0].mxu0 %v206
  %v284 = vpop.f32.mrb[0].mxu0
  %v285 = vadd.f32 %v128, %v284
  %v286 = vpop.f32.mrb[0].mxu0
  %v287 = vadd.f32 %v132, %v286
  %v288 = vpop.f32.mrb[0].mxu0
  %v289 = vadd.f32 %v128, %v288
  %v290 = vpop.f32.mrb[0].mxu0
  %v291 = vadd.f32 %v132, %v290
  %292 = vmatprep.mubr.bf16.mxu0 0
  %293 = vmatmul.mubr.bf16.gmra.mrb[0].mxu0 %v209
  %v294 = vpop.f32.mrb[0].mxu0
  %v295 = vadd.f32 %v128, %v294
  %v296 = vpop.f32.mrb[0].mxu0
  %v297 = vadd.f32 %v132, %v296
  %v298 = vpop.f32.mrb[0].mxu0
  %v299 = vadd.f32 %v128, %v298
  %v300 = vpop.f32.mrb[0].mxu0
  %v301 = vadd.f32 %v132, %v300
  %302 = vmatprep.mubr.bf16.mxu0 0
  %303 = vmatmul.mubr.bf16.gmra.mrb[0].mxu0 %v212
  %v304 = vpop.f32.mrb[0].mxu0
  %v305 = vadd.f32 %v128, %v304
  %v306 = vpop.f32.mrb[0].mxu0
  %v307 = vadd.f32 %v132, %v306
  %v308 = vpop.f32.mrb[0].mxu0
  %v309 = vadd.f32 %v128, %v308
  %v310 = vpop.f32.mrb[0].mxu0
  %v311 = vadd.f32 %v132, %v310
  %312 = vmatprep.mubr.bf16.mxu0 0
  %313 = vmatmul.mubr.bf16.gmra.mrb[0].mxu0 %v215
  %v314 = vpop.f32.mrb[0].mxu0
  %v315 = vadd.f32 %v128, %v314
  %v316 = vpop.f32.mrb[0].mxu0
  %v317 = vadd.f32 %v132, %v316
  %v318 = vpop.f32.mrb[0].mxu0
  %v319 = vadd.f32 %v128, %v318
  %v320 = vpop.f32.mrb[0].mxu0
  %v321 = vadd.f32 %v132, %v320
  %322 = vmatprep.mubr.bf16.mxu0 0
  %323 = vmatmul.mubr.bf16.gmra.mrb[0].mxu0 %v218
  %v324 = vpop.f32.mrb[0].mxu0
  %v325 = vadd.f32 %v128, %v324
  %v326 = vpop.f32.mrb[0].mxu0
  %v327 = vadd.f32 %v132, %v326
  %v328 = vpop.f32.mrb[0].mxu0
  %v329 = vadd.f32 %v128, %v328
  %v330 = vpop.f32.mrb[0].mxu0
  %v331 = vadd.f32 %v132, %v330
  %332 = vdwg.mxu0
  %v333 = vmul.f32 %v255, %v255
  %v334 = vmul.f32 %v257, %v257
  %v335 = vmul.f32 %v259, %v259
  %v336 = vmul.f32 %v261, %v261
  %v337 = vmul.f32 %v265, %v265
  %v338 = vmul.f32 %v267, %v267
  %v339 = vmul.f32 %v269, %v269
  %v340 = vmul.f32 %v271, %v271
  %v341 = vmul.f32 %v275, %v275
  %v342 = vmul.f32 %v277, %v277
  %v343 = vmul.f32 %v279, %v279
  %v344 = vmul.f32 %v281, %v281
  %v345 = vmul.f32 %v285, %v285
  %v346 = vmul.f32 %v287, %v287
  %v347 = vmul.f32 %v289, %v289
  %v348 = vmul.f32 %v291, %v291
  %v349 = vmul.f32 %v295, %v295
  %v350 = vmul.f32 %v297, %v297
  %v351 = vmul.f32 %v299, %v299
  %v352 = vmul.f32 %v301, %v301
  %v353 = vmul.f32 %v305, %v305
  %v354 = vmul.f32 %v307, %v307
  %v355 = vmul.f32 %v309, %v309
  %v356 = vmul.f32 %v311, %v311
  %v357 = vmul.f32 %v315, %v315
  %v358 = vmul.f32 %v317, %v317
  %v359 = vmul.f32 %v319, %v319
  %v360 = vmul.f32 %v321, %v321
  %v361 = vmul.f32 %v325, %v325
  %v362 = vmul.f32 %v327, %v327
  %v363 = vmul.f32 %v329, %v329
  %v364 = vmul.f32 %v331, %v331
  %v365 = vmul.f32 %v255, %v333
  %v366 = vmul.f32 %v257, %v334
  %v367 = vmul.f32 %v259, %v335
  %v368 = vmul.f32 %v261, %v336
  %v369 = vmul.f32 %v265, %v337
  %v370 = vmul.f32 %v267, %v338
  %v371 = vmul.f32 %v269, %v339
  %v372 = vmul.f32 %v271, %v340
  %v373 = vmul.f32 %v275, %v341
  %v374 = vmul.f32 %v277, %v342
  %v375 = vmul.f32 %v279, %v343
  %v376 = vmul.f32 %v281, %v344
  %v377 = vmul.f32 %v285, %v345
  %v378 = vmul.f32 %v287, %v346
  %v379 = vmul.f32 %v289, %v347
  %v380 = vmul.f32 %v291, %v348
  %v381 = vmul.f32 %v295, %v349
  %v382 = vmul.f32 %v297, %v350
  %v383 = vmul.f32 %v299, %v351
  %v384 = vmul.f32 %v301, %v352
  %v385 = vmul.f32 %v305, %v353
  %v386 = vmul.f32 %v307, %v354
  %v387 = vmul.f32 %v309, %v355
  %v388 = vmul.f32 %v311, %v356
  %v389 = vmul.f32 %v315, %v357
  %v390 = vmul.f32 %v317, %v358
  %v391 = vmul.f32 %v319, %v359
  %v392 = vmul.f32 %v321, %v360
  %v393 = vmul.f32 %v325, %v361
  %v394 = vmul.f32 %v327, %v362
  %v395 = vmul.f32 %v329, %v363
  %v396 = vmul.f32 %v331, %v364
  %v397 = vmul.f32 %v365, 0.044715
  %v398 = vmul.f32 %v366, 0.044715
  %v399 = vmul.f32 %v367, 0.044715
  %v400 = vmul.f32 %v368, 0.044715
  %v401 = vmul.f32 %v369, 0.044715
  %v402 = vmul.f32 %v370, 0.044715
  %v403 = vmul.f32 %v371, 0.044715
  %v404 = vmul.f32 %v372, 0.044715
  %v405 = vmul.f32 %v373, 0.044715
  %v406 = vmul.f32 %v374, 0.044715
  %v407 = vmul.f32 %v375, 0.044715
  %v408 = vmul.f32 %v376, 0.044715
  %v409 = vmul.f32 %v377, 0.044715
  %v410 = vmul.f32 %v378, 0.044715
  %v411 = vmul.f32 %v379, 0.044715
  %v412 = vmul.f32 %v380, 0.044715
  %v413 = vmul.f32 %v381, 0.044715
  %v414 = vmul.f32 %v382, 0.044715
  %v415 = vmul.f32 %v383, 0.044715
  %v416 = vmul.f32 %v384, 0.044715
  %v417 = vmul.f32 %v385, 0.044715
  %v418 = vmul.f32 %v386, 0.044715
  %v419 = vmul.f32 %v387, 0.044715
  %v420 = vmul.f32 %v388, 0.044715
  %v421 = vmul.f32 %v389, 0.044715
  %v422 = vmul.f32 %v390, 0.044715
  %v423 = vmul.f32 %v391, 0.044715
  %v424 = vmul.f32 %v392, 0.044715
  %v425 = vmul.f32 %v393, 0.044715
  %v426 = vmul.f32 %v394, 0.044715
  %v427 = vmul.f32 %v395, 0.044715
  %v428 = vmul.f32 %v396, 0.044715
  %v429 = vadd.f32 %v255, %v397
  %v430 = vadd.f32 %v257, %v398
  %v431 = vadd.f32 %v259, %v399
  %v432 = vadd.f32 %v261, %v400
  %v433 = vadd.f32 %v265, %v401
  %v434 = vadd.f32 %v267, %v402
  %v435 = vadd.f32 %v269, %v403
  %v436 = vadd.f32 %v271, %v404
  %v437 = vadd.f32 %v275, %v405
  %v438 = vadd.f32 %v277, %v406
  %v439 = vadd.f32 %v279, %v407
  %v440 = vadd.f32 %v281, %v408
  %v441 = vadd.f32 %v285, %v409
  %v442 = vadd.f32 %v287, %v410
  %v443 = vadd.f32 %v289, %v411
  %v444 = vadd.f32 %v291, %v412
  %v445 = vadd.f32 %v295, %v413
  %v446 = vadd.f32 %v297, %v414
  %v447 = vadd.f32 %v299, %v415
  %v448 = vadd.f32 %v301, %v416
  %v449 = vadd.f32 %v305, %v417
  %v450 = vadd.f32 %v307, %v418
  %v451 = vadd.f32 %v309, %v419
  %v452 = vadd.f32 %v311, %v420
  %v453 = vadd.f32 %v315, %v421
  %v454 = vadd.f32 %v317, %v422
  %v455 = vadd.f32 %v319, %v423
  %v456 = vadd.f32 %v321, %v424
  %v457 = vadd.f32 %v325, %v425
  %v458 = vadd.f32 %v327, %v426
  %v459 = vadd.f32 %v329, %v427
  %v460 = vadd.f32 %v331, %v428
  %v461 = vmul.f32 %v429, 0.7978846
  %v462 = vmul.f32 %v430, 0.7978846
  %v463 = vmul.f32 %v431, 0.7978846
  %v464 = vmul.f32 %v432, 0.7978846
  %v465 = vmul.f32 %v433, 0.7978846
  %v466 = vmul.f32 %v434, 0.7978846
  %v467 = vmul.f32 %v435, 0.7978846
  %v468 = vmul.f32 %v436, 0.7978846
  %v469 = vmul.f32 %v437, 0.7978846
  %v470 = vmul.f32 %v438, 0.7978846
  %v471 = vmul.f32 %v439, 0.7978846
  %v472 = vmul.f32 %v440, 0.7978846
  %v473 = vmul.f32 %v441, 0.7978846
  %v474 = vmul.f32 %v442, 0.7978846
  %v475 = vmul.f32 %v443, 0.7978846
  %v476 = vmul.f32 %v444, 0.7978846
  %v477 = vmul.f32 %v445, 0.7978846
  %v478 = vmul.f32 %v446, 0.7978846
  %v479 = vmul.f32 %v447, 0.7978846
  %v480 = vmul.f32 %v448, 0.7978846
  %v481 = vmul.f32 %v449, 0.7978846
  %v482 = vmul.f32 %v450, 0.7978846
  %v483 = vmul.f32 %v451, 0.7978846
  %v484 = vmul.f32 %v452, 0.7978846
  %v485 = vmul.f32 %v453, 0.7978846
  %v486 = vmul.f32 %v454, 0.7978846
  %v487 = vmul.f32 %v455, 0.7978846
  %v488 = vmul.f32 %v456, 0.7978846
  %v489 = vmul.f32 %v457, 0.7978846
  %v490 = vmul.f32 %v458, 0.7978846
  %v491 = vmul.f32 %v459, 0.7978846
  %v492 = vmul.f32 %v460, 0.7978846
  %v493 = vtanh.pop %v461
  %v494 = vtanh.pop %v462
  %v495 = vtanh.pop %v463
  %v496 = vtanh.pop %v464
  %v497 = vtanh.pop %v465
  %v498 = vtanh.pop %v466
  %v499 = vtanh.pop %v467
  %v500 = vtanh.pop %v468
  %v501 = vtanh.pop %v469
  %v502 = vtanh.pop %v470
  %v503 = vtanh.pop %v471
  %v504 = vtanh.pop %v472
  %v505 = vtanh.pop %v473
  %v506 = vtanh.pop %v474
  %v507 = vtanh.pop %v475
  %v508 = vtanh.pop %v476
  %v509 = vtanh.pop %v477
  %v510 = vtanh.pop %v478
  %v511 = vtanh.pop %v479
  %v512 = vtanh.pop %v480
  %v513 = vtanh.pop %v481
  %v514 = vtanh.pop %v482
  %v515 = vtanh.pop %v483
  %v516 = vtanh.pop %v484
  %v517 = vtanh.pop %v485
  %v518 = vtanh.pop %v486
  %v519 = vtanh.pop %v487
  %v520 = vtanh.pop %v488
  %v521 = vtanh.pop %v489
  %v522 = vtanh.pop %v490
  %v523 = vtanh.pop %v491
  %v524 = vtanh.pop %v492
  %v525 = vadd.f32 %v493, 1.0
  %v526 = vadd.f32 %v494, 1.0
  %v527 = vadd.f32 %v495, 1.0
  %v528 = vadd.f32 %v496, 1.0
  %v529 = vadd.f32 %v497, 1.0
  %v530 = vadd.f32 %v498, 1.0
  %v531 = vadd.f32 %v499, 1.0
  %v532 = vadd.f32 %v500, 1.0
  %v533 = vadd.f32 %v501, 1.0
  %v534 = vadd.f32 %v502, 1.0
  %v535 = vadd.f32 %v503, 1.0
  %v536 = vadd.f32 %v504, 1.0
  %v537 = vadd.f32 %v505, 1.0
  %v538 = vadd.f32 %v506, 1.0
  %v539 = vadd.f32 %v507, 1.0
  %v540 = vadd.f32 %v508, 1.0
  %v541 = vadd.f32 %v509, 1.0
  %v542 = vadd.f32 %v510, 1.0
  %v543 = vadd.f32 %v511, 1.0
  %v544 = vadd.f32 %v512, 1.0
  %v545 = vadd.f32 %v513, 1.0
  %v546 = vadd.f32 %v514, 1.0
  %v547 = vadd.f32 %v515, 1.0
  %v548 = vadd.f32 %v516, 1.0
  %v549 = vadd.f32 %v517, 1.0
  %v550 = vadd.f32 %v518, 1.0
  %v551 = vadd.f32 %v519, 1.0
  %v552 = vadd.f32 %v520, 1.0
  %v553 = vadd.f32 %v521, 1.0
  %v554 = vadd.f32 %v522, 1.0
  %v555 = vadd.f32 %v523, 1.0
  %v556 = vadd.f32 %v524, 1.0
  %v557 = vmul.f32 %v525, 0.5
  %v558 = vmul.f32 %v526, 0.5
  %v559 = vmul.f32 %v527, 0.5
  %v560 = vmul.f32 %v528, 0.5
  %v561 = vmul.f32 %v529, 0.5
  %v562 = vmul.f32 %v530, 0.5
  %v563 = vmul.f32 %v531, 0.5
  %v564 = vmul.f32 %v532, 0.5
  %v565 = vmul.f32 %v533, 0.5
  %v566 = vmul.f32 %v534, 0.5
  %v567 = vmul.f32 %v535, 0.5
  %v568 = vmul.f32 %v536, 0.5
  %v569 = vmul.f32 %v537, 0.5
  %v570 = vmul.f32 %v538, 0.5
  %v571 = vmul.f32 %v539, 0.5
  %v572 = vmul.f32 %v540, 0.5
  %v573 = vmul.f32 %v541, 0.5
  %v574 = vmul.f32 %v542, 0.5
  %v575 = vmul.f32 %v543, 0.5
  %v576 = vmul.f32 %v544, 0.5
  %v577 = vmul.f32 %v545, 0.5
  %v578 = vmul.f32 %v546, 0.5
  %v579 = vmul.f32 %v547, 0.5
  %v580 = vmul.f32 %v548, 0.5
  %v581 = vmul.f32 %v549, 0.5
  %v582 = vmul.f32 %v550, 0.5
  %v583 = vmul.f32 %v551, 0.5
  %v584 = vmul.f32 %v552, 0.5
  %v585 = vmul.f32 %v553, 0.5
  %v586 = vmul.f32 %v554, 0.5
  %v587 = vmul.f32 %v555, 0.5
  %v588 = vmul.f32 %v556, 0.5
  %v589 = vmul.f32 %v255, %v557
  %v590 = vmul.f32 %v257, %v558
  %v591 = vmul.f32 %v259, %v559
  %v592 = vmul.f32 %v261, %v560
  %v593 = vmul.f32 %v265, %v561
  %v594 = vmul.f32 %v267, %v562
  %v595 = vmul.f32 %v269, %v563
  %v596 = vmul.f32 %v271, %v564
  %v597 = vmul.f32 %v275, %v565
  %v598 = vmul.f32 %v277, %v566
  %v599 = vmul.f32 %v279, %v567
  %v600 = vmul.f32 %v281, %v568
  %v601 = vmul.f32 %v285, %v569
  %v602 = vmul.f32 %v287, %v570
  %v603 = vmul.f32 %v289, %v571
  %v604 = vmul.f32 %v291, %v572
  %v605 = vmul.f32 %v295, %v573
  %v606 = vmul.f32 %v297, %v574
  %v607 = vmul.f32 %v299, %v575
  %v608 = vmul.f32 %v301, %v576
  %v609 = vmul.f32 %v305, %v577
  %v610 = vmul.f32 %v307, %v578
  %v611 = vmul.f32 %v309, %v579
  %v612 = vmul.f32 %v311, %v580
  %v613 = vmul.f32 %v315, %v581
  %v614 = vmul.f32 %v317, %v582
  %v615 = vmul.f32 %v319, %v583
  %v616 = vmul.f32 %v321, %v584
  %v617 = vmul.f32 %v325, %v585
  %v618 = vmul.f32 %v327, %v586
  %v619 = vmul.f32 %v329, %v587
  %v620 = vmul.f32 %v331, %v588
  %v621 = vpack.c.bf16 %v591, %v589
  %v622 = vpack.c.bf16 %v592, %v590
  %v623 = vpack.c.bf16 %v595, %v593
  %v624 = vpack.c.bf16 %v596, %v594
  %v625 = vpack.c.bf16 %v599, %v597
  %v626 = vpack.c.bf16 %v600, %v598
  %v627 = vpack.c.bf16 %v603, %v601
  %v628 = vpack.c.bf16 %v604, %v602
  %v629 = vpack.c.bf16 %v607, %v605
  %v630 = vpack.c.bf16 %v608, %v606
  %v631 = vpack.c.bf16 %v611, %v609
  %v632 = vpack.c.bf16 %v612, %v610
  %v633 = vpack.c.bf16 %v615, %v613
  %v634 = vpack.c.bf16 %v616, %v614
  %v635 = vpack.c.bf16 %v619, %v617
  %v636 = vpack.c.bf16 %v620, %v618
  %v638 = vlaneseq
  %v639 = vshrl.u32 %v638, 7
  %v640 = vsub.s32 0, %v639
  %v641 = vrot.slane %v115, %v640
  %v675 = vunpack.c.l.b16 %v34
  %v676 = vunpack.c.l.b16 %v35
  %v677 = vunpack.c.l.b16 %v36
  %v678 = vunpack.c.l.b16 %v37
  %v679 = vunpack.c.l.b16 %v38
  %v680 = vunpack.c.l.b16 %v39
  %v681 = vunpack.c.l.b16 %v40
  %v682 = vunpack.c.l.b16 %v41
  %v683 = vunpack.c.l.b16 %v42
  %v684 = vunpack.c.l.b16 %v43
  %v685 = vunpack.c.l.b16 %v44
  %v686 = vunpack.c.l.b16 %v45
  %v687 = vunpack.c.l.b16 %v46
  %v688 = vunpack.c.l.b16 %v47
  %v689 = vunpack.c.l.b16 %v48
  %v690 = vunpack.c.l.b16 %v49
  %v691 = vunpack.c.l.b16 %v50
  %v692 = vunpack.c.l.b16 %v51
  %v693 = vunpack.c.l.b16 %v52
  %v694 = vunpack.c.l.b16 %v53
  %v695 = vunpack.c.l.b16 %v54
  %v696 = vunpack.c.l.b16 %v55
  %v697 = vunpack.c.l.b16 %v56
  %v698 = vunpack.c.l.b16 %v57
  %v699 = vunpack.c.l.b16 %v58
  %v700 = vunpack.c.l.b16 %v59
  %v701 = vunpack.c.l.b16 %v60
  %v702 = vunpack.c.l.b16 %v61
  %v703 = vunpack.c.l.b16 %v62
  %v704 = vunpack.c.l.b16 %v63
  %v705 = vunpack.c.l.b16 %v64
  %v706 = vunpack.c.l.b16 %v65
  %v707 = vpack.c.b16 %v676, %v675
  %v708 = vpack.c.b16 %v678, %v677
  %v709 = vpack.c.b16 %v680, %v679
  %v710 = vpack.c.b16 %v682, %v681
  %v711 = vpack.c.b16 %v684, %v683
  %v712 = vpack.c.b16 %v686, %v685
  %v713 = vpack.c.b16 %v688, %v687
  %v714 = vpack.c.b16 %v690, %v689
  %v715 = vpack.c.b16 %v692, %v691
  %v716 = vpack.c.b16 %v694, %v693
  %v717 = vpack.c.b16 %v696, %v695
  %v718 = vpack.c.b16 %v698, %v697
  %v719 = vpack.c.b16 %v700, %v699
  %v720 = vpack.c.b16 %v702, %v701
  %v721 = vpack.c.b16 %v704, %v703
  %v722 = vpack.c.b16 %v706, %v705
  %739 = vmatprep.subr.bf16.mxu0 0
  %740 = vmatpush1.bf16.msra.mxu0 %v707
  %741 = vmatprep.subr.bf16.mxu0 0
  %742 = vmatpush1.bf16.msra.mxu0 %v708
  %743 = vmatprep.subr.bf16.mxu0 0
  %744 = vmatpush1.bf16.msra.mxu0 %v709
  %745 = vmatprep.subr.bf16.mxu0 0
  %746 = vmatpush1.bf16.msra.mxu0 %v710
  %747 = vmatprep.subr.bf16.mxu0 0
  %748 = vmatpush1.bf16.msra.mxu0 %v711
  %749 = vmatprep.subr.bf16.mxu0 0
  %750 = vmatpush1.bf16.msra.mxu0 %v712
  %751 = vmatprep.subr.bf16.mxu0 0
  %752 = vmatpush1.bf16.msra.mxu0 %v713
  %753 = vmatprep.subr.bf16.mxu0 0
  %754 = vmatpush1.bf16.msra.mxu0 %v714
  %755 = vmatprep.subr.bf16.mxu0 0
  %756 = vmatpush1.bf16.msra.mxu0 %v715
  %757 = vmatprep.subr.bf16.mxu0 0
  %758 = vmatpush1.bf16.msra.mxu0 %v716
  %759 = vmatprep.subr.bf16.mxu0 0
  %760 = vmatpush1.bf16.msra.mxu0 %v717
  %761 = vmatprep.subr.bf16.mxu0 0
  %762 = vmatpush1.bf16.msra.mxu0 %v718
  %763 = vmatprep.subr.bf16.mxu0 0
  %764 = vmatpush1.bf16.msra.mxu0 %v719
  %765 = vmatprep.subr.bf16.mxu0 0
  %766 = vmatpush1.bf16.msra.mxu0 %v720
  %767 = vmatprep.subr.bf16.mxu0 0
  %768 = vmatpush1.bf16.msra.mxu0 %v721
  %769 = vmatprep.subr.bf16.mxu0 0
  %770 = vmatpush1.bf16.msra.mxu0 %v722
  %771 = vmatprep.mubr.bf16.mxu0 %v622
  %772 = vmatmul.mubr.bf16.gmra.mrb[0].mxu0 %v621
  %v773 = vpop.f32.mrb[0].mxu0
  %v774 = vadd.f32 %v641, %v773
  %v775 = vpop.f32.mrb[0].mxu0
  %v776 = vpop.f32.mrb[0].mxu0
  %v777 = vadd.f32 %v641, %v776
  %v778 = vpop.f32.mrb[0].mxu0
  %779 = vmatprep.mubr.bf16.mxu0 %v624
  %780 = vmatmul.mubr.bf16.gmra.mrb[0].mxu0 %v623
  %v781 = vpop.f32.mrb[0].mxu0
  %v782 = vadd.f32 %v641, %v781
  %v783 = vpop.f32.mrb[0].mxu0
  %v784 = vpop.f32.mrb[0].mxu0
  %v785 = vadd.f32 %v641, %v784
  %v786 = vpop.f32.mrb[0].mxu0
  %787 = vmatprep.mubr.bf16.mxu0 %v626
  %788 = vmatmul.mubr.bf16.gmra.mrb[0].mxu0 %v625
  %v789 = vpop.f32.mrb[0].mxu0
  %v790 = vadd.f32 %v641, %v789
  %v791 = vpop.f32.mrb[0].mxu0
  %v792 = vpop.f32.mrb[0].mxu0
  %v793 = vadd.f32 %v641, %v792
  %v794 = vpop.f32.mrb[0].mxu0
  %795 = vmatprep.mubr.bf16.mxu0 %v628
  %796 = vmatmul.mubr.bf16.gmra.mrb[0].mxu0 %v627
  %v797 = vpop.f32.mrb[0].mxu0
  %v798 = vadd.f32 %v641, %v797
  %v799 = vpop.f32.mrb[0].mxu0
  %v800 = vpop.f32.mrb[0].mxu0
  %v801 = vadd.f32 %v641, %v800
  %v802 = vpop.f32.mrb[0].mxu0
  %803 = vmatprep.mubr.bf16.mxu0 %v630
  %804 = vmatmul.mubr.bf16.gmra.mrb[0].mxu0 %v629
  %v805 = vpop.f32.mrb[0].mxu0
  %v806 = vadd.f32 %v641, %v805
  %v807 = vpop.f32.mrb[0].mxu0
  %v808 = vpop.f32.mrb[0].mxu0
  %v809 = vadd.f32 %v641, %v808
  %v810 = vpop.f32.mrb[0].mxu0
  %811 = vmatprep.mubr.bf16.mxu0 %v632
  %812 = vmatmul.mubr.bf16.gmra.mrb[0].mxu0 %v631
  %v813 = vpop.f32.mrb[0].mxu0
  %v814 = vadd.f32 %v641, %v813
  %v815 = vpop.f32.mrb[0].mxu0
  %v816 = vpop.f32.mrb[0].mxu0
  %v817 = vadd.f32 %v641, %v816
  %v818 = vpop.f32.mrb[0].mxu0
  %819 = vmatprep.mubr.bf16.mxu0 %v634
  %820 = vmatmul.mubr.bf16.gmra.mrb[0].mxu0 %v633
  %v821 = vpop.f32.mrb[0].mxu0
  %v822 = vadd.f32 %v641, %v821
  %v823 = vpop.f32.mrb[0].mxu0
  %v824 = vpop.f32.mrb[0].mxu0
  %v825 = vadd.f32 %v641, %v824
  %v826 = vpop.f32.mrb[0].mxu0
  %827 = vmatprep.mubr.bf16.mxu0 %v636
  %828 = vmatmul.mubr.bf16.gmra.mrb[0].mxu0 %v635
  %v829 = vpop.f32.mrb[0].mxu0
  %v830 = vadd.f32 %v641, %v829
  %v831 = vpop.f32.mrb[0].mxu0
  %v832 = vpop.f32.mrb[0].mxu0
  %v833 = vadd.f32 %v641, %v832
  %v834 = vpop.f32.mrb[0].mxu0
  %835 = vdwg.mxu0
  %v836 = vmul.f32 %v774, %v774
  %v837 = vmul.f32 %v777, %v777
  %v838 = vmul.f32 %v782, %v782
  %v839 = vmul.f32 %v785, %v785
  %v840 = vmul.f32 %v790, %v790
  %v841 = vmul.f32 %v793, %v793
  %v842 = vmul.f32 %v798, %v798
  %v843 = vmul.f32 %v801, %v801
  %v844 = vmul.f32 %v806, %v806
  %v845 = vmul.f32 %v809, %v809
  %v846 = vmul.f32 %v814, %v814
  %v847 = vmul.f32 %v817, %v817
  %v848 = vmul.f32 %v822, %v822
  %v849 = vmul.f32 %v825, %v825
  %v850 = vmul.f32 %v830, %v830
  %v851 = vmul.f32 %v833, %v833
  %v852 = vmul.f32 %v774, %v836
  %v853 = vmul.f32 %v777, %v837
  %v854 = vmul.f32 %v782, %v838
  %v855 = vmul.f32 %v785, %v839
  %v856 = vmul.f32 %v790, %v840
  %v857 = vmul.f32 %v793, %v841
  %v858 = vmul.f32 %v798, %v842
  %v859 = vmul.f32 %v801, %v843
  %v860 = vmul.f32 %v806, %v844
  %v861 = vmul.f32 %v809, %v845
  %v862 = vmul.f32 %v814, %v846
  %v863 = vmul.f32 %v817, %v847
  %v864 = vmul.f32 %v822, %v848
  %v865 = vmul.f32 %v825, %v849
  %v866 = vmul.f32 %v830, %v850
  %v867 = vmul.f32 %v833, %v851
  %v868 = vmul.f32 %v852, 0.044715
  %v869 = vmul.f32 %v853, 0.044715
  %v870 = vmul.f32 %v854, 0.044715
  %v871 = vmul.f32 %v855, 0.044715
  %v872 = vmul.f32 %v856, 0.044715
  %v873 = vmul.f32 %v857, 0.044715
  %v874 = vmul.f32 %v858, 0.044715
  %v875 = vmul.f32 %v859, 0.044715
  %v876 = vmul.f32 %v860, 0.044715
  %v877 = vmul.f32 %v861, 0.044715
  %v878 = vmul.f32 %v862, 0.044715
  %v879 = vmul.f32 %v863, 0.044715
  %v880 = vmul.f32 %v864, 0.044715
  %v881 = vmul.f32 %v865, 0.044715
  %v882 = vmul.f32 %v866, 0.044715
  %v883 = vmul.f32 %v867, 0.044715
  %v884 = vadd.f32 %v774, %v868
  %v885 = vadd.f32 %v777, %v869
  %v886 = vadd.f32 %v782, %v870
  %v887 = vadd.f32 %v785, %v871
  %v888 = vadd.f32 %v790, %v872
  %v889 = vadd.f32 %v793, %v873
  %v890 = vadd.f32 %v798, %v874
  %v891 = vadd.f32 %v801, %v875
  %v892 = vadd.f32 %v806, %v876
  %v893 = vadd.f32 %v809, %v877
  %v894 = vadd.f32 %v814, %v878
  %v895 = vadd.f32 %v817, %v879
  %v896 = vadd.f32 %v822, %v880
  %v897 = vadd.f32 %v825, %v881
  %v898 = vadd.f32 %v830, %v882
  %v899 = vadd.f32 %v833, %v883
  %v900 = vmul.f32 %v884, 0.7978846
  %v901 = vmul.f32 %v885, 0.7978846
  %v902 = vmul.f32 %v886, 0.7978846
  %v903 = vmul.f32 %v887, 0.7978846
  %v904 = vmul.f32 %v888, 0.7978846
  %v905 = vmul.f32 %v889, 0.7978846
  %v906 = vmul.f32 %v890, 0.7978846
  %v907 = vmul.f32 %v891, 0.7978846
  %v908 = vmul.f32 %v892, 0.7978846
  %v909 = vmul.f32 %v893, 0.7978846
  %v910 = vmul.f32 %v894, 0.7978846
  %v911 = vmul.f32 %v895, 0.7978846
  %v912 = vmul.f32 %v896, 0.7978846
  %v913 = vmul.f32 %v897, 0.7978846
  %v914 = vmul.f32 %v898, 0.7978846
  %v915 = vmul.f32 %v899, 0.7978846
  %v916 = vtanh.pop %v900
  %v917 = vtanh.pop %v901
  %v918 = vtanh.pop %v902
  %v919 = vtanh.pop %v903
  %v920 = vtanh.pop %v904
  %v921 = vtanh.pop %v905
  %v922 = vtanh.pop %v906
  %v923 = vtanh.pop %v907
  %v924 = vtanh.pop %v908
  %v925 = vtanh.pop %v909
  %v926 = vtanh.pop %v910
  %v927 = vtanh.pop %v911
  %v928 = vtanh.pop %v912
  %v929 = vtanh.pop %v913
  %v930 = vtanh.pop %v914
  %v931 = vtanh.pop %v915
  %v932 = vadd.f32 %v916, 1.0
  %v933 = vadd.f32 %v917, 1.0
  %v934 = vadd.f32 %v918, 1.0
  %v935 = vadd.f32 %v919, 1.0
  %v936 = vadd.f32 %v920, 1.0
  %v937 = vadd.f32 %v921, 1.0
  %v938 = vadd.f32 %v922, 1.0
  %v939 = vadd.f32 %v923, 1.0
  %v940 = vadd.f32 %v924, 1.0
  %v941 = vadd.f32 %v925, 1.0
  %v942 = vadd.f32 %v926, 1.0
  %v943 = vadd.f32 %v927, 1.0
  %v944 = vadd.f32 %v928, 1.0
  %v945 = vadd.f32 %v929, 1.0
  %v946 = vadd.f32 %v930, 1.0
  %v947 = vadd.f32 %v931, 1.0
  %v948 = vmul.f32 %v932, 0.5
  %v949 = vmul.f32 %v933, 0.5
  %v950 = vmul.f32 %v934, 0.5
  %v951 = vmul.f32 %v935, 0.5
  %v952 = vmul.f32 %v936, 0.5
  %v953 = vmul.f32 %v937, 0.5
  %v954 = vmul.f32 %v938, 0.5
  %v955 = vmul.f32 %v939, 0.5
  %v956 = vmul.f32 %v940, 0.5
  %v957 = vmul.f32 %v941, 0.5
  %v958 = vmul.f32 %v942, 0.5
  %v959 = vmul.f32 %v943, 0.5
  %v960 = vmul.f32 %v944, 0.5
  %v961 = vmul.f32 %v945, 0.5
  %v962 = vmul.f32 %v946, 0.5
  %v963 = vmul.f32 %v947, 0.5
  %v964 = vmul.f32 %v774, %v948
  %v965 = vmul.f32 %v777, %v949
  %v966 = vmul.f32 %v782, %v950
  %v967 = vmul.f32 %v785, %v951
  %v968 = vmul.f32 %v790, %v952
  %v969 = vmul.f32 %v793, %v953
  %v970 = vmul.f32 %v798, %v954
  %v971 = vmul.f32 %v801, %v955
  %v972 = vmul.f32 %v806, %v956
  %v973 = vmul.f32 %v809, %v957
  %v974 = vmul.f32 %v814, %v958
  %v975 = vmul.f32 %v817, %v959
  %v976 = vmul.f32 %v822, %v960
  %v977 = vmul.f32 %v825, %v961
  %v978 = vmul.f32 %v830, %v962
  %v979 = vmul.f32 %v833, %v963
  %v980 = vpack.c.bf16 %v965, %v964
  %v981 = vpack.c.bf16 %v967, %v966
  %v982 = vpack.c.bf16 %v969, %v968
  %v983 = vpack.c.bf16 %v971, %v970
  %v984 = vpack.c.bf16 %v973, %v972
  %v985 = vpack.c.bf16 %v975, %v974
  %v986 = vpack.c.bf16 %v977, %v976
  %v987 = vpack.c.bf16 %v979, %v978
  %v989 = vlaneseq
  %v990 = vshrl.u32 %v989, 7
  %v991 = vsub.s32 0, %v990
  %v992 = vrot.slane %v116, %v991
  %v1010 = vunpack.c.l.b16 %v66
  %v1011 = vunpack.c.l.b16 %v67
  %v1012 = vunpack.c.l.b16 %v68
  %v1013 = vunpack.c.l.b16 %v69
  %v1014 = vunpack.c.l.b16 %v70
  %v1015 = vunpack.c.l.b16 %v71
  %v1016 = vunpack.c.l.b16 %v72
  %v1017 = vunpack.c.l.b16 %v73
  %v1018 = vunpack.c.l.b16 %v74
  %v1019 = vunpack.c.l.b16 %v75
  %v1020 = vunpack.c.l.b16 %v76
  %v1021 = vunpack.c.l.b16 %v77
  %v1022 = vunpack.c.l.b16 %v78
  %v1023 = vunpack.c.l.b16 %v79
  %v1024 = vunpack.c.l.b16 %v80
  %v1025 = vunpack.c.l.b16 %v81
  %v1026 = vpack.c.b16 %v1011, %v1010
  %v1027 = vpack.c.b16 %v1013, %v1012
  %v1028 = vpack.c.b16 %v1015, %v1014
  %v1029 = vpack.c.b16 %v1017, %v1016
  %v1030 = vpack.c.b16 %v1019, %v1018
  %v1031 = vpack.c.b16 %v1021, %v1020
  %v1032 = vpack.c.b16 %v1023, %v1022
  %v1033 = vpack.c.b16 %v1025, %v1024
  %1042 = vmatprep.subr.bf16.mxu0 0
  %1043 = vmatpush1.bf16.msra.mxu0 %v1026
  %1044 = vmatprep.subr.bf16.mxu0 0
  %1045 = vmatpush1.bf16.msra.mxu0 %v1027
  %1046 = vmatprep.subr.bf16.mxu0 0
  %1047 = vmatpush1.bf16.msra.mxu0 %v1028
  %1048 = vmatprep.subr.bf16.mxu0 0
  %1049 = vmatpush1.bf16.msra.mxu0 %v1029
  %1050 = vmatprep.subr.bf16.mxu0 0
  %1051 = vmatpush1.bf16.msra.mxu0 %v1030
  %1052 = vmatprep.subr.bf16.mxu0 0
  %1053 = vmatpush1.bf16.msra.mxu0 %v1031
  %1054 = vmatprep.subr.bf16.mxu0 0
  %1055 = vmatpush1.bf16.msra.mxu0 %v1032
  %1056 = vmatprep.subr.bf16.mxu0 0
  %1057 = vmatpush1.bf16.msra.mxu0 %v1033
  %1058 = vmatprep.subr.bf16.mxu0 0
  %1059 = vmatpush1.bf16.msra.mxu0 0
  %1060 = vmatprep.subr.bf16.mxu0 0
  %1061 = vmatpush1.bf16.msra.mxu0 0
  %1062 = vmatprep.subr.bf16.mxu0 0
  %1063 = vmatpush1.bf16.msra.mxu0 0
  %1064 = vmatprep.subr.bf16.mxu0 0
  %1065 = vmatpush1.bf16.msra.mxu0 0
  %1066 = vmatprep.subr.bf16.mxu0 0
  %1067 = vmatpush1.bf16.msra.mxu0 0
  %1068 = vmatprep.subr.bf16.mxu0 0
  %1069 = vmatpush1.bf16.msra.mxu0 0
  %1070 = vmatprep.subr.bf16.mxu0 0
  %1071 = vmatpush1.bf16.msra.mxu0 0
  %1072 = vmatprep.subr.bf16.mxu0 0
  %1073 = vmatpush1.bf16.msra.mxu0 0
  %1074 = vmatprep.mubr.bf16.mxu0 0
  %1075 = vmatmul.mubr.bf16.gmra.mrb[0].mxu0 %v980
  %v1076 = vpop.f32.mrb[0].mxu0
  %v1077 = vadd.f32 %v992, %v1076
  %v1078 = vpop.f32.mrb[0].mxu0
  %v1079 = vpop.f32.mrb[0].mxu0
  %v1080 = vadd.f32 %v992, %v1079
  %v1081 = vpop.f32.mrb[0].mxu0
  %1082 = vmatprep.mubr.bf16.mxu0 0
  %1083 = vmatmul.mubr.bf16.gmra.mrb[0].mxu0 %v981
  %v1084 = vpop.f32.mrb[0].mxu0
  %v1085 = vadd.f32 %v992, %v1084
  %v1086 = vpop.f32.mrb[0].mxu0
  %v1087 = vpop.f32.mrb[0].mxu0
  %v1088 = vadd.f32 %v992, %v1087
  %v1089 = vpop.f32.mrb[0].mxu0
  %1090 = vmatprep.mubr.bf16.mxu0 0
  %1091 = vmatmul.mubr.bf16.gmra.mrb[0].mxu0 %v982
  %v1092 = vpop.f32.mrb[0].mxu0
  %v1093 = vadd.f32 %v992, %v1092
  %v1094 = vpop.f32.mrb[0].mxu0
  %v1095 = vpop.f32.mrb[0].mxu0
  %v1096 = vadd.f32 %v992, %v1095
  %v1097 = vpop.f32.mrb[0].mxu0
  %1098 = vmatprep.mubr.bf16.mxu0 0
  %1099 = vmatmul.mubr.bf16.gmra.mrb[0].mxu0 %v983
  %v1100 = vpop.f32.mrb[0].mxu0
  %v1101 = vadd.f32 %v992, %v1100
  %v1102 = vpop.f32.mrb[0].mxu0
  %v1103 = vpop.f32.mrb[0].mxu0
  %v1104 = vadd.f32 %v992, %v1103
  %v1105 = vpop.f32.mrb[0].mxu0
  %1106 = vmatprep.mubr.bf16.mxu0 0
  %1107 = vmatmul.mubr.bf16.gmra.mrb[0].mxu0 %v984
  %v1108 = vpop.f32.mrb[0].mxu0
  %v1109 = vadd.f32 %v992, %v1108
  %v1110 = vpop.f32.mrb[0].mxu0
  %v1111 = vpop.f32.mrb[0].mxu0
  %v1112 = vadd.f32 %v992, %v1111
  %v1113 = vpop.f32.mrb[0].mxu0
  %1114 = vmatprep.mubr.bf16.mxu0 0
  %1115 = vmatmul.mubr.bf16.gmra.mrb[0].mxu0 %v985
  %v1116 = vpop.f32.mrb[0].mxu0
  %v1117 = vadd.f32 %v992, %v1116
  %v1118 = vpop.f32.mrb[0].mxu0
  %v1119 = vpop.f32.mrb[0].mxu0
  %v1120 = vadd.f32 %v992, %v1119
  %v1121 = vpop.f32.mrb[0].mxu0
  %1122 = vmatprep.mubr.bf16.mxu0 0
  %1123 = vmatmul.mubr.bf16.gmra.mrb[0].mxu0 %v986
  %v1124 = vpop.f32.mrb[0].mxu0
  %v1125 = vadd.f32 %v992, %v1124
  %v1126 = vpop.f32.mrb[0].mxu0
  %v1127 = vpop.f32.mrb[0].mxu0
  %v1128 = vadd.f32 %v992, %v1127
  %v1129 = vpop.f32.mrb[0].mxu0
  %1130 = vmatprep.mubr.bf16.mxu0 0
  %1131 = vmatmul.mubr.bf16.gmra.mrb[0].mxu0 %v987
  %v1132 = vpop.f32.mrb[0].mxu0
  %v1133 = vadd.f32 %v992, %v1132
  %v1134 = vpop.f32.mrb[0].mxu0
  %v1135 = vpop.f32.mrb[0].mxu0
  %v1136 = vadd.f32 %v992, %v1135
  %v1137 = vpop.f32.mrb[0].mxu0
  %1138 = vdwg.mxu0
  %1139 = vmax.xlane.f32.xlu0 %v1077
  %v1140 = vpop.xlane.xlu0 %1139
  %1141 = vmax.xlane.f32.xlu0 %v1080
  %v1142 = vpop.xlane.xlu0 %1141
  %1143 = vmax.xlane.f32.xlu0 %v1085
  %v1144 = vpop.xlane.xlu0 %1143
  %1145 = vmax.xlane.f32.xlu0 %v1088
  %v1146 = vpop.xlane.xlu0 %1145
  %1147 = vmax.xlane.f32.xlu0 %v1093
  %v1148 = vpop.xlane.xlu0 %1147
  %1149 = vmax.xlane.f32.xlu0 %v1096
  %v1150 = vpop.xlane.xlu0 %1149
  %1151 = vmax.xlane.f32.xlu0 %v1101
  %v1152 = vpop.xlane.xlu0 %1151
  %1153 = vmax.xlane.f32.xlu0 %v1104
  %v1154 = vpop.xlane.xlu0 %1153
  %1155 = vmax.xlane.f32.xlu0 %v1109
  %v1156 = vpop.xlane.xlu0 %1155
  %1157 = vmax.xlane.f32.xlu0 %v1112
  %v1158 = vpop.xlane.xlu0 %1157
  %1159 = vmax.xlane.f32.xlu0 %v1117
  %v1160 = vpop.xlane.xlu0 %1159
  %1161 = vmax.xlane.f32.xlu0 %v1120
  %v1162 = vpop.xlane.xlu0 %1161
  %1163 = vmax.xlane.f32.xlu0 %v1125
  %v1164 = vpop.xlane.xlu0 %1163
  %1165 = vmax.xlane.f32.xlu0 %v1128
  %v1166 = vpop.xlane.xlu0 %1165
  %1167 = vmax.xlane.f32.xlu0 %v1133
  %v1168 = vpop.xlane.xlu0 %1167
  %1169 = vmax.xlane.f32.xlu0 %v1136
  %v1170 = vpop.xlane.xlu0 %1169
  %v1171 = vsub.f32 %v1077, %v1140
  %v1172 = vsub.f32 %v1080, %v1142
  %v1173 = vsub.f32 %v1085, %v1144
  %v1174 = vsub.f32 %v1088, %v1146
  %v1175 = vsub.f32 %v1093, %v1148
  %v1176 = vsub.f32 %v1096, %v1150
  %v1177 = vsub.f32 %v1101, %v1152
  %v1178 = vsub.f32 %v1104, %v1154
  %v1179 = vsub.f32 %v1109, %v1156
  %v1180 = vsub.f32 %v1112, %v1158
  %v1181 = vsub.f32 %v1117, %v1160
  %v1182 = vsub.f32 %v1120, %v1162
  %v1183 = vsub.f32 %v1125, %v1164
  %v1184 = vsub.f32 %v1128, %v1166
  %v1185 = vsub.f32 %v1133, %v1168
  %v1186 = vsub.f32 %v1136, %v1170
  %v1187 = vmul.f32 %v1171, 1.442695
  %v1188 = vpow.pop %v1187
  %v1189 = vmul.f32 %v1172, 1.442695
  %v1190 = vpow.pop %v1189
  %v1191 = vmul.f32 %v1173, 1.442695
  %v1192 = vpow.pop %v1191
  %v1193 = vmul.f32 %v1174, 1.442695
  %v1194 = vpow.pop %v1193
  %v1195 = vmul.f32 %v1175, 1.442695
  %v1196 = vpow.pop %v1195
  %v1197 = vmul.f32 %v1176, 1.442695
  %v1198 = vpow.pop %v1197
  %v1199 = vmul.f32 %v1177, 1.442695
  %v1200 = vpow.pop %v1199
  %v1201 = vmul.f32 %v1178, 1.442695
  %v1202 = vpow.pop %v1201
  %v1203 = vmul.f32 %v1179, 1.442695
  %v1204 = vpow.pop %v1203
  %v1205 = vmul.f32 %v1180, 1.442695
  %v1206 = vpow.pop %v1205
  %v1207 = vmul.f32 %v1181, 1.442695
  %v1208 = vpow.pop %v1207
  %v1209 = vmul.f32 %v1182, 1.442695
  %v1210 = vpow.pop %v1209
  %v1211 = vmul.f32 %v1183, 1.442695
  %v1212 = vpow.pop %v1211
  %v1213 = vmul.f32 %v1184, 1.442695
  %v1214 = vpow.pop %v1213
  %v1215 = vmul.f32 %v1185, 1.442695
  %v1216 = vpow.pop %v1215
  %v1217 = vmul.f32 %v1186, 1.442695
  %v1218 = vpow.pop %v1217
  %1219 = vadd.xlane.f32.xlu0 %v1188
  %v1220 = vpop.xlane.xlu0 %1219
  %1221 = vadd.xlane.f32.xlu0 %v1190
  %v1222 = vpop.xlane.xlu0 %1221
  %1223 = vadd.xlane.f32.xlu0 %v1192
  %v1224 = vpop.xlane.xlu0 %1223
  %1225 = vadd.xlane.f32.xlu0 %v1194
  %v1226 = vpop.xlane.xlu0 %1225
  %1227 = vadd.xlane.f32.xlu0 %v1196
  %v1228 = vpop.xlane.xlu0 %1227
  %1229 = vadd.xlane.f32.xlu0 %v1198
  %v1230 = vpop.xlane.xlu0 %1229
  %1231 = vadd.xlane.f32.xlu0 %v1200
  %v1232 = vpop.xlane.xlu0 %1231
  %1233 = vadd.xlane.f32.xlu0 %v1202
  %v1234 = vpop.xlane.xlu0 %1233
  %1235 = vadd.xlane.f32.xlu0 %v1204
  %v1236 = vpop.xlane.xlu0 %1235
  %1237 = vadd.xlane.f32.xlu0 %v1206
  %v1238 = vpop.xlane.xlu0 %1237
  %1239 = vadd.xlane.f32.xlu0 %v1208
  %v1240 = vpop.xlane.xlu0 %1239
  %1241 = vadd.xlane.f32.xlu0 %v1210
  %v1242 = vpop.xlane.xlu0 %1241
  %1243 = vadd.xlane.f32.xlu0 %v1212
  %v1244 = vpop.xlane.xlu0 %1243
  %1245 = vadd.xlane.f32.xlu0 %v1214
  %v1246 = vpop.xlane.xlu0 %1245
  %1247 = vadd.xlane.f32.xlu0 %v1216
  %v1248 = vpop.xlane.xlu0 %1247
  %1249 = vadd.xlane.f32.xlu0 %v1218
  %v1250 = vpop.xlane.xlu0 %1249
  %v1251 = vrcp.pop %v1220
  %v1252 = vrcp.pop %v1222
  %v1253 = vrcp.pop %v1224
  %v1254 = vrcp.pop %v1226
  %v1255 = vrcp.pop %v1228
  %v1256 = vrcp.pop %v1230
  %v1257 = vrcp.pop %v1232
  %v1258 = vrcp.pop %v1234
  %v1259 = vrcp.pop %v1236
  %v1260 = vrcp.pop %v1238
  %v1261 = vrcp.pop %v1240
  %v1262 = vrcp.pop %v1242
  %v1263 = vrcp.pop %v1244
  %v1264 = vrcp.pop %v1246
  %v1265 = vrcp.pop %v1248
  %v1266 = vrcp.pop %v1250
  %v1267 = vmul.f32 %v1188, %v1251
  %v1268 = vmul.f32 %v1190, %v1252
  %v1269 = vmul.f32 %v1192, %v1253
  %v1270 = vmul.f32 %v1194, %v1254
  %v1271 = vmul.f32 %v1196, %v1255
  %v1272 = vmul.f32 %v1198, %v1256
  %v1273 = vmul.f32 %v1200, %v1257
  %v1274 = vmul.f32 %v1202, %v1258
  %v1275 = vmul.f32 %v1204, %v1259
  %v1276 = vmul.f32 %v1206, %v1260
  %v1277 = vmul.f32 %v1208, %v1261
  %v1278 = vmul.f32 %v1210, %v1262
  %v1279 = vmul.f32 %v1212, %v1263
  %v1280 = vmul.f32 %v1214, %v1264
  %v1281 = vmul.f32 %v1216, %v1265
  %v1282 = vmul.f32 %v1218, %v1266
  %v1283 = vpack.c.bf16 %v1268, %v1267
  %v1284 = vpack.c.bf16 %v1270, %v1269
  %v1285 = vpack.c.bf16 %v1272, %v1271
  %v1286 = vpack.c.bf16 %v1274, %v1273
  %v1287 = vpack.c.bf16 %v1276, %v1275
  %v1288 = vpack.c.bf16 %v1278, %v1277
  %v1289 = vpack.c.bf16 %v1280, %v1279
  %v1290 = vpack.c.bf16 %v1282, %v1281
  %v1292 = vlaneseq
  %v1293 = vshrl.u32 %v1292, 7
  %v1294 = vsub.s32 0, %v1293
  %v1295 = vrot.slane %v117, %v1294
  %v1313 = vunpack.c.l.b16 %v82
  %v1314 = vunpack.c.l.b16 %v83
  %v1315 = vunpack.c.l.b16 %v84
  %v1316 = vunpack.c.l.b16 %v85
  %v1317 = vunpack.c.l.b16 %v86
  %v1318 = vunpack.c.l.b16 %v87
  %v1319 = vunpack.c.l.b16 %v88
  %v1320 = vunpack.c.l.b16 %v89
  %v1321 = vunpack.c.l.b16 %v90
  %v1322 = vunpack.c.l.b16 %v91
  %v1323 = vunpack.c.l.b16 %v92
  %v1324 = vunpack.c.l.b16 %v93
  %v1325 = vunpack.c.l.b16 %v94
  %v1326 = vunpack.c.l.b16 %v95
  %v1327 = vunpack.c.l.b16 %v96
  %v1328 = vunpack.c.l.b16 %v97
  %v1329 = vpack.c.b16 %v1314, %v1313
  %v1330 = vpack.c.b16 %v1316, %v1315
  %v1331 = vpack.c.b16 %v1318, %v1317
  %v1332 = vpack.c.b16 %v1320, %v1319
  %v1333 = vpack.c.b16 %v1322, %v1321
  %v1334 = vpack.c.b16 %v1324, %v1323
  %v1335 = vpack.c.b16 %v1326, %v1325
  %v1336 = vpack.c.b16 %v1328, %v1327
  %1345 = vmatprep.subr.bf16.mxu0 0
  %1346 = vmatpush1.bf16.msra.mxu0 %v1329
  %1347 = vmatprep.subr.bf16.mxu0 0
  %1348 = vmatpush1.bf16.msra.mxu0 %v1330
  %1349 = vmatprep.subr.bf16.mxu0 0
  %1350 = vmatpush1.bf16.msra.mxu0 %v1331
  %1351 = vmatprep.subr.bf16.mxu0 0
  %1352 = vmatpush1.bf16.msra.mxu0 %v1332
  %1353 = vmatprep.subr.bf16.mxu0 0
  %1354 = vmatpush1.bf16.msra.mxu0 %v1333
  %1355 = vmatprep.subr.bf16.mxu0 0
  %1356 = vmatpush1.bf16.msra.mxu0 %v1334
  %1357 = vmatprep.subr.bf16.mxu0 0
  %1358 = vmatpush1.bf16.msra.mxu0 %v1335
  %1359 = vmatprep.subr.bf16.mxu0 0
  %1360 = vmatpush1.bf16.msra.mxu0 %v1336
  %1361 = vmatprep.subr.bf16.mxu0 0
  %1362 = vmatpush1.bf16.msra.mxu0 0
  %1363 = vmatprep.subr.bf16.mxu0 0
  %1364 = vmatpush1.bf16.msra.mxu0 0
  %1365 = vmatprep.subr.bf16.mxu0 0
  %1366 = vmatpush1.bf16.msra.mxu0 0
  %1367 = vmatprep.subr.bf16.mxu0 0
  %1368 = vmatpush1.bf16.msra.mxu0 0
  %1369 = vmatprep.subr.bf16.mxu0 0
  %1370 = vmatpush1.bf16.msra.mxu0 0
  %1371 = vmatprep.subr.bf16.mxu0 0
  %1372 = vmatpush1.bf16.msra.mxu0 0
  %1373 = vmatprep.subr.bf16.mxu0 0
  %1374 = vmatpush1.bf16.msra.mxu0 0
  %1375 = vmatprep.subr.bf16.mxu0 0
  %1376 = vmatpush1.bf16.msra.mxu0 0
  %1377 = vmatprep.mubr.bf16.mxu0 0
  %1378 = vmatmul.mubr.bf16.gmra.mrb[0].mxu0 %v1283
  %v1379 = vpop.f32.mrb[0].mxu0
  %v1380 = vadd.f32 %v1295, %v1379
  %v1381 = vpop.f32.mrb[0].mxu0
  %v1382 = vpop.f32.mrb[0].mxu0
  %v1383 = vadd.f32 %v1295, %v1382
  %v1384 = vpop.f32.mrb[0].mxu0
  %1385 = vmatprep.mubr.bf16.mxu0 0
  %1386 = vmatmul.mubr.bf16.gmra.mrb[0].mxu0 %v1284
  %v1387 = vpop.f32.mrb[0].mxu0
  %v1388 = vadd.f32 %v1295, %v1387
  %v1389 = vpop.f32.mrb[0].mxu0
  %v1390 = vpop.f32.mrb[0].mxu0
  %v1391 = vadd.f32 %v1295, %v1390
  %v1392 = vpop.f32.mrb[0].mxu0
  %1393 = vmatprep.mubr.bf16.mxu0 0
  %1394 = vmatmul.mubr.bf16.gmra.mrb[0].mxu0 %v1285
  %v1395 = vpop.f32.mrb[0].mxu0
  %v1396 = vadd.f32 %v1295, %v1395
  %v1397 = vpop.f32.mrb[0].mxu0
  %v1398 = vpop.f32.mrb[0].mxu0
  %v1399 = vadd.f32 %v1295, %v1398
  %v1400 = vpop.f32.mrb[0].mxu0
  %1401 = vmatprep.mubr.bf16.mxu0 0
  %1402 = vmatmul.mubr.bf16.gmra.mrb[0].mxu0 %v1286
  %v1403 = vpop.f32.mrb[0].mxu0
  %v1404 = vadd.f32 %v1295, %v1403
  %v1405 = vpop.f32.mrb[0].mxu0
  %v1406 = vpop.f32.mrb[0].mxu0
  %v1407 = vadd.f32 %v1295, %v1406
  %v1408 = vpop.f32.mrb[0].mxu0
  %1409 = vmatprep.mubr.bf16.mxu0 0
  %1410 = vmatmul.mubr.bf16.gmra.mrb[0].mxu0 %v1287
  %v1411 = vpop.f32.mrb[0].mxu0
  %v1412 = vadd.f32 %v1295, %v1411
  %v1413 = vpop.f32.mrb[0].mxu0
  %v1414 = vpop.f32.mrb[0].mxu0
  %v1415 = vadd.f32 %v1295, %v1414
  %v1416 = vpop.f32.mrb[0].mxu0
  %1417 = vmatprep.mubr.bf16.mxu0 0
  %1418 = vmatmul.mubr.bf16.gmra.mrb[0].mxu0 %v1288
  %v1419 = vpop.f32.mrb[0].mxu0
  %v1420 = vadd.f32 %v1295, %v1419
  %v1421 = vpop.f32.mrb[0].mxu0
  %v1422 = vpop.f32.mrb[0].mxu0
  %v1423 = vadd.f32 %v1295, %v1422
  %v1424 = vpop.f32.mrb[0].mxu0
  %1425 = vmatprep.mubr.bf16.mxu0 0
  %1426 = vmatmul.mubr.bf16.gmra.mrb[0].mxu0 %v1289
  %v1427 = vpop.f32.mrb[0].mxu0
  %v1428 = vadd.f32 %v1295, %v1427
  %v1429 = vpop.f32.mrb[0].mxu0
  %v1430 = vpop.f32.mrb[0].mxu0
  %v1431 = vadd.f32 %v1295, %v1430
  %v1432 = vpop.f32.mrb[0].mxu0
  %1433 = vmatprep.mubr.bf16.mxu0 0
  %1434 = vmatmul.mubr.bf16.gmra.mrb[0].mxu0 %v1290
  %v1435 = vpop.f32.mrb[0].mxu0
  %v1436 = vadd.f32 %v1295, %v1435
  %v1437 = vpop.f32.mrb[0].mxu0
  %v1438 = vpop.f32.mrb[0].mxu0
  %v1439 = vadd.f32 %v1295, %v1438
  %v1440 = vpop.f32.mrb[0].mxu0
  %1441 = vdwg.mxu0
  %v1442 = vmul.f32 %v1380, %v1380
  %v1443 = vmul.f32 %v1383, %v1383
  %v1444 = vmul.f32 %v1388, %v1388
  %v1445 = vmul.f32 %v1391, %v1391
  %v1446 = vmul.f32 %v1396, %v1396
  %v1447 = vmul.f32 %v1399, %v1399
  %v1448 = vmul.f32 %v1404, %v1404
  %v1449 = vmul.f32 %v1407, %v1407
  %v1450 = vmul.f32 %v1412, %v1412
  %v1451 = vmul.f32 %v1415, %v1415
  %v1452 = vmul.f32 %v1420, %v1420
  %v1453 = vmul.f32 %v1423, %v1423
  %v1454 = vmul.f32 %v1428, %v1428
  %v1455 = vmul.f32 %v1431, %v1431
  %v1456 = vmul.f32 %v1436, %v1436
  %v1457 = vmul.f32 %v1439, %v1439
  %v1458 = vmul.f32 %v1380, %v1442
  %v1459 = vmul.f32 %v1383, %v1443
  %v1460 = vmul.f32 %v1388, %v1444
  %v1461 = vmul.f32 %v1391, %v1445
  %v1462 = vmul.f32 %v1396, %v1446
  %v1463 = vmul.f32 %v1399, %v1447
  %v1464 = vmul.f32 %v1404, %v1448
  %v1465 = vmul.f32 %v1407, %v1449
  %v1466 = vmul.f32 %v1412, %v1450
  %v1467 = vmul.f32 %v1415, %v1451
  %v1468 = vmul.f32 %v1420, %v1452
  %v1469 = vmul.f32 %v1423, %v1453
  %v1470 = vmul.f32 %v1428, %v1454
  %v1471 = vmul.f32 %v1431, %v1455
  %v1472 = vmul.f32 %v1436, %v1456
  %v1473 = vmul.f32 %v1439, %v1457
  %v1474 = vmul.f32 %v1458, 0.044715
  %v1475 = vmul.f32 %v1459, 0.044715
  %v1476 = vmul.f32 %v1460, 0.044715
  %v1477 = vmul.f32 %v1461, 0.044715
  %v1478 = vmul.f32 %v1462, 0.044715
  %v1479 = vmul.f32 %v1463, 0.044715
  %v1480 = vmul.f32 %v1464, 0.044715
  %v1481 = vmul.f32 %v1465, 0.044715
  %v1482 = vmul.f32 %v1466, 0.044715
  %v1483 = vmul.f32 %v1467, 0.044715
  %v1484 = vmul.f32 %v1468, 0.044715
  %v1485 = vmul.f32 %v1469, 0.044715
  %v1486 = vmul.f32 %v1470, 0.044715
  %v1487 = vmul.f32 %v1471, 0.044715
  %v1488 = vmul.f32 %v1472, 0.044715
  %v1489 = vmul.f32 %v1473, 0.044715
  %v1490 = vadd.f32 %v1380, %v1474
  %v1491 = vadd.f32 %v1383, %v1475
  %v1492 = vadd.f32 %v1388, %v1476
  %v1493 = vadd.f32 %v1391, %v1477
  %v1494 = vadd.f32 %v1396, %v1478
  %v1495 = vadd.f32 %v1399, %v1479
  %v1496 = vadd.f32 %v1404, %v1480
  %v1497 = vadd.f32 %v1407, %v1481
  %v1498 = vadd.f32 %v1412, %v1482
  %v1499 = vadd.f32 %v1415, %v1483
  %v1500 = vadd.f32 %v1420, %v1484
  %v1501 = vadd.f32 %v1423, %v1485
  %v1502 = vadd.f32 %v1428, %v1486
  %v1503 = vadd.f32 %v1431, %v1487
  %v1504 = vadd.f32 %v1436, %v1488
  %v1505 = vadd.f32 %v1439, %v1489
  %v1506 = vmul.f32 %v1490, 0.7978846
  %v1507 = vmul.f32 %v1491, 0.7978846
  %v1508 = vmul.f32 %v1492, 0.7978846
  %v1509 = vmul.f32 %v1493, 0.7978846
  %v1510 = vmul.f32 %v1494, 0.7978846
  %v1511 = vmul.f32 %v1495, 0.7978846
  %v1512 = vmul.f32 %v1496, 0.7978846
  %v1513 = vmul.f32 %v1497, 0.7978846
  %v1514 = vmul.f32 %v1498, 0.7978846
  %v1515 = vmul.f32 %v1499, 0.7978846
  %v1516 = vmul.f32 %v1500, 0.7978846
  %v1517 = vmul.f32 %v1501, 0.7978846
  %v1518 = vmul.f32 %v1502, 0.7978846
  %v1519 = vmul.f32 %v1503, 0.7978846
  %v1520 = vmul.f32 %v1504, 0.7978846
  %v1521 = vmul.f32 %v1505, 0.7978846
  %v1522 = vtanh.pop %v1506
  %v1523 = vtanh.pop %v1507
  %v1524 = vtanh.pop %v1508
  %v1525 = vtanh.pop %v1509
  %v1526 = vtanh.pop %v1510
  %v1527 = vtanh.pop %v1511
  %v1528 = vtanh.pop %v1512
  %v1529 = vtanh.pop %v1513
  %v1530 = vtanh.pop %v1514
  %v1531 = vtanh.pop %v1515
  %v1532 = vtanh.pop %v1516
  %v1533 = vtanh.pop %v1517
  %v1534 = vtanh.pop %v1518
  %v1535 = vtanh.pop %v1519
  %v1536 = vtanh.pop %v1520
  %v1537 = vtanh.pop %v1521
  %v1538 = vadd.f32 %v1522, 1.0
  %v1539 = vadd.f32 %v1523, 1.0
  %v1540 = vadd.f32 %v1524, 1.0
  %v1541 = vadd.f32 %v1525, 1.0
  %v1542 = vadd.f32 %v1526, 1.0
  %v1543 = vadd.f32 %v1527, 1.0
  %v1544 = vadd.f32 %v1528, 1.0
  %v1545 = vadd.f32 %v1529, 1.0
  %v1546 = vadd.f32 %v1530, 1.0
  %v1547 = vadd.f32 %v1531, 1.0
  %v1548 = vadd.f32 %v1532, 1.0
  %v1549 = vadd.f32 %v1533, 1.0
  %v1550 = vadd.f32 %v1534, 1.0
  %v1551 = vadd.f32 %v1535, 1.0
  %v1552 = vadd.f32 %v1536, 1.0
  %v1553 = vadd.f32 %v1537, 1.0
  %v1554 = vmul.f32 %v1538, 0.5
  %v1555 = vmul.f32 %v1539, 0.5
  %v1556 = vmul.f32 %v1540, 0.5
  %v1557 = vmul.f32 %v1541, 0.5
  %v1558 = vmul.f32 %v1542, 0.5
  %v1559 = vmul.f32 %v1543, 0.5
  %v1560 = vmul.f32 %v1544, 0.5
  %v1561 = vmul.f32 %v1545, 0.5
  %v1562 = vmul.f32 %v1546, 0.5
  %v1563 = vmul.f32 %v1547, 0.5
  %v1564 = vmul.f32 %v1548, 0.5
  %v1565 = vmul.f32 %v1549, 0.5
  %v1566 = vmul.f32 %v1550, 0.5
  %v1567 = vmul.f32 %v1551, 0.5
  %v1568 = vmul.f32 %v1552, 0.5
  %v1569 = vmul.f32 %v1553, 0.5
  %v1570 = vmul.f32 %v1380, %v1554
  %v1571 = vmul.f32 %v1383, %v1555
  %v1572 = vmul.f32 %v1388, %v1556
  %v1573 = vmul.f32 %v1391, %v1557
  %v1574 = vmul.f32 %v1396, %v1558
  %v1575 = vmul.f32 %v1399, %v1559
  %v1576 = vmul.f32 %v1404, %v1560
  %v1577 = vmul.f32 %v1407, %v1561
  %v1578 = vmul.f32 %v1412, %v1562
  %v1579 = vmul.f32 %v1415, %v1563
  %v1580 = vmul.f32 %v1420, %v1564
  %v1581 = vmul.f32 %v1423, %v1565
  %v1582 = vmul.f32 %v1428, %v1566
  %v1583 = vmul.f32 %v1431, %v1567
  %v1584 = vmul.f32 %v1436, %v1568
  %v1585 = vmul.f32 %v1439, %v1569
  %v1586 = vpack.c.bf16 %v1571, %v1570
  %v1587 = vpack.c.bf16 %v1573, %v1572
  %v1588 = vpack.c.bf16 %v1575, %v1574
  %v1589 = vpack.c.bf16 %v1577, %v1576
  %v1590 = vpack.c.bf16 %v1579, %v1578
  %v1591 = vpack.c.bf16 %v1581, %v1580
  %v1592 = vpack.c.bf16 %v1583, %v1582
  %v1593 = vpack.c.bf16 %v1585, %v1584
  %v1595 = vlaneseq
  %v1596 = vshrl.u32 %v1595, 7
  %v1597 = vsub.s32 0, %v1596
  %v1598 = vrot.slane %v118, %v1597
  %v1616 = vunpack.c.l.b16 %v98
  %v1617 = vunpack.c.l.b16 %v99
  %v1618 = vunpack.c.l.b16 %v100
  %v1619 = vunpack.c.l.b16 %v101
  %v1620 = vunpack.c.l.b16 %v102
  %v1621 = vunpack.c.l.b16 %v103
  %v1622 = vunpack.c.l.b16 %v104
  %v1623 = vunpack.c.l.b16 %v105
  %v1624 = vunpack.c.l.b16 %v106
  %v1625 = vunpack.c.l.b16 %v107
  %v1626 = vunpack.c.l.b16 %v108
  %v1627 = vunpack.c.l.b16 %v109
  %v1628 = vunpack.c.l.b16 %v110
  %v1629 = vunpack.c.l.b16 %v111
  %v1630 = vunpack.c.l.b16 %v112
  %v1631 = vunpack.c.l.b16 %v113
  %v1632 = vpack.c.b16 %v1617, %v1616
  %v1633 = vpack.c.b16 %v1619, %v1618
  %v1634 = vpack.c.b16 %v1621, %v1620
  %v1635 = vpack.c.b16 %v1623, %v1622
  %v1636 = vpack.c.b16 %v1625, %v1624
  %v1637 = vpack.c.b16 %v1627, %v1626
  %v1638 = vpack.c.b16 %v1629, %v1628
  %v1639 = vpack.c.b16 %v1631, %v1630
  %1648 = vmatprep.subr.bf16.mxu0 0
  %1649 = vmatpush1.bf16.msra.mxu0 %v1632
  %1650 = vmatprep.subr.bf16.mxu0 0
  %1651 = vmatpush1.bf16.msra.mxu0 %v1633
  %1652 = vmatprep.subr.bf16.mxu0 0
  %1653 = vmatpush1.bf16.msra.mxu0 %v1634
  %1654 = vmatprep.subr.bf16.mxu0 0
  %1655 = vmatpush1.bf16.msra.mxu0 %v1635
  %1656 = vmatprep.subr.bf16.mxu0 0
  %1657 = vmatpush1.bf16.msra.mxu0 %v1636
  %1658 = vmatprep.subr.bf16.mxu0 0
  %1659 = vmatpush1.bf16.msra.mxu0 %v1637
  %1660 = vmatprep.subr.bf16.mxu0 0
  %1661 = vmatpush1.bf16.msra.mxu0 %v1638
  %1662 = vmatprep.subr.bf16.mxu0 0
  %1663 = vmatpush1.bf16.msra.mxu0 %v1639
  %1664 = vmatprep.subr.bf16.mxu0 0
  %1665 = vmatpush1.bf16.msra.mxu0 0
  %1666 = vmatprep.subr.bf16.mxu0 0
  %1667 = vmatpush1.bf16.msra.mxu0 0
  %1668 = vmatprep.subr.bf16.mxu0 0
  %1669 = vmatpush1.bf16.msra.mxu0 0
  %1670 = vmatprep.subr.bf16.mxu0 0
  %1671 = vmatpush1.bf16.msra.mxu0 0
  %1672 = vmatprep.subr.bf16.mxu0 0
  %1673 = vmatpush1.bf16.msra.mxu0 0
  %1674 = vmatprep.subr.bf16.mxu0 0
  %1675 = vmatpush1.bf16.msra.mxu0 0
  %1676 = vmatprep.subr.bf16.mxu0 0
  %1677 = vmatpush1.bf16.msra.mxu0 0
  %1678 = vmatprep.subr.bf16.mxu0 0
  %1679 = vmatpush1.bf16.msra.mxu0 0
  %1680 = vmatprep.mubr.bf16.mxu0 0
  %1681 = vmatmul.mubr.bf16.gmra.mrb[0].mxu0 %v1586
  %v1682 = vpop.f32.mrb[0].mxu0
  %v1683 = vadd.f32 %v1598, %v1682
  %v1684 = vpop.f32.mrb[0].mxu0
  %v1685 = vpop.f32.mrb[0].mxu0
  %v1686 = vadd.f32 %v1598, %v1685
  %v1687 = vpop.f32.mrb[0].mxu0
  %1688 = vmatprep.mubr.bf16.mxu0 0
  %1689 = vmatmul.mubr.bf16.gmra.mrb[0].mxu0 %v1587
  %v1690 = vpop.f32.mrb[0].mxu0
  %v1691 = vadd.f32 %v1598, %v1690
  %v1692 = vpop.f32.mrb[0].mxu0
  %v1693 = vpop.f32.mrb[0].mxu0
  %v1694 = vadd.f32 %v1598, %v1693
  %v1695 = vpop.f32.mrb[0].mxu0
  %1696 = vmatprep.mubr.bf16.mxu0 0
  %1697 = vmatmul.mubr.bf16.gmra.mrb[0].mxu0 %v1588
  %v1698 = vpop.f32.mrb[0].mxu0
  %v1699 = vadd.f32 %v1598, %v1698
  %v1700 = vpop.f32.mrb[0].mxu0
  %v1701 = vpop.f32.mrb[0].mxu0
  %v1702 = vadd.f32 %v1598, %v1701
  %v1703 = vpop.f32.mrb[0].mxu0
  %1704 = vmatprep.mubr.bf16.mxu0 0
  %1705 = vmatmul.mubr.bf16.gmra.mrb[0].mxu0 %v1589
  %v1706 = vpop.f32.mrb[0].mxu0
  %v1707 = vadd.f32 %v1598, %v1706
  %v1708 = vpop.f32.mrb[0].mxu0
  %v1709 = vpop.f32.mrb[0].mxu0
  %v1710 = vadd.f32 %v1598, %v1709
  %v1711 = vpop.f32.mrb[0].mxu0
  %1712 = vmatprep.mubr.bf16.mxu0 0
  %1713 = vmatmul.mubr.bf16.gmra.mrb[0].mxu0 %v1590
  %v1714 = vpop.f32.mrb[0].mxu0
  %v1715 = vadd.f32 %v1598, %v1714
  %v1716 = vpop.f32.mrb[0].mxu0
  %v1717 = vpop.f32.mrb[0].mxu0
  %v1718 = vadd.f32 %v1598, %v1717
  %v1719 = vpop.f32.mrb[0].mxu0
  %1720 = vmatprep.mubr.bf16.mxu0 0
  %1721 = vmatmul.mubr.bf16.gmra.mrb[0].mxu0 %v1591
  %v1722 = vpop.f32.mrb[0].mxu0
  %v1723 = vadd.f32 %v1598, %v1722
  %v1724 = vpop.f32.mrb[0].mxu0
  %v1725 = vpop.f32.mrb[0].mxu0
  %v1726 = vadd.f32 %v1598, %v1725
  %v1727 = vpop.f32.mrb[0].mxu0
  %1728 = vmatprep.mubr.bf16.mxu0 0
  %1729 = vmatmul.mubr.bf16.gmra.mrb[0].mxu0 %v1592
  %v1730 = vpop.f32.mrb[0].mxu0
  %v1731 = vadd.f32 %v1598, %v1730
  %v1732 = vpop.f32.mrb[0].mxu0
  %v1733 = vpop.f32.mrb[0].mxu0
  %v1734 = vadd.f32 %v1598, %v1733
  %v1735 = vpop.f32.mrb[0].mxu0
  %1736 = vmatprep.mubr.bf16.mxu0 0
  %1737 = vmatmul.mubr.bf16.gmra.mrb[0].mxu0 %v1593
  %v1738 = vpop.f32.mrb[0].mxu0
  %v1739 = vadd.f32 %v1598, %v1738
  %v1740 = vpop.f32.mrb[0].mxu0
  %v1741 = vpop.f32.mrb[0].mxu0
  %v1742 = vadd.f32 %v1598, %v1741
  %v1743 = vpop.f32.mrb[0].mxu0
  %1744 = vdwg.mxu0
  %v1745 = vmul.f32 %v1683, 0.5
  %v1746 = vmul.f32 %v1686, 0.5
  %v1747 = vmul.f32 %v1691, 0.5
  %v1748 = vmul.f32 %v1694, 0.5
  %v1749 = vmul.f32 %v1699, 0.5
  %v1750 = vmul.f32 %v1702, 0.5
  %v1751 = vmul.f32 %v1707, 0.5
  %v1752 = vmul.f32 %v1710, 0.5
  %v1753 = vmul.f32 %v1715, 0.5
  %v1754 = vmul.f32 %v1718, 0.5
  %v1755 = vmul.f32 %v1723, 0.5
  %v1756 = vmul.f32 %v1726, 0.5
  %v1757 = vmul.f32 %v1731, 0.5
  %v1758 = vmul.f32 %v1734, 0.5
  %v1759 = vmul.f32 %v1739, 0.5
  %v1760 = vmul.f32 %v1742, 0.5
  %v1761 = vtanh.pop %v1745
  %v1762 = vtanh.pop %v1746
  %v1763 = vtanh.pop %v1747
  %v1764 = vtanh.pop %v1748
  %v1765 = vtanh.pop %v1749
  %v1766 = vtanh.pop %v1750
  %v1767 = vtanh.pop %v1751
  %v1768 = vtanh.pop %v1752
  %v1769 = vtanh.pop %v1753
  %v1770 = vtanh.pop %v1754
  %v1771 = vtanh.pop %v1755
  %v1772 = vtanh.pop %v1756
  %v1773 = vtanh.pop %v1757
  %v1774 = vtanh.pop %v1758
  %v1775 = vtanh.pop %v1759
  %v1776 = vtanh.pop %v1760
  %v1777 = vadd.f32 %v1761, 1.0
  %v1778 = vadd.f32 %v1762, 1.0
  %v1779 = vadd.f32 %v1763, 1.0
  %v1780 = vadd.f32 %v1764, 1.0
  %v1781 = vadd.f32 %v1765, 1.0
  %v1782 = vadd.f32 %v1766, 1.0
  %v1783 = vadd.f32 %v1767, 1.0
  %v1784 = vadd.f32 %v1768, 1.0
  %v1785 = vadd.f32 %v1769, 1.0
  %v1786 = vadd.f32 %v1770, 1.0
  %v1787 = vadd.f32 %v1771, 1.0
  %v1788 = vadd.f32 %v1772, 1.0
  %v1789 = vadd.f32 %v1773, 1.0
  %v1790 = vadd.f32 %v1774, 1.0
  %v1791 = vadd.f32 %v1775, 1.0
  %v1792 = vadd.f32 %v1776, 1.0
  %v1793 = vmul.f32 %v1777, 0.5
  %v1794 = vmul.f32 %v1778, 0.5
  %v1795 = vmul.f32 %v1779, 0.5
  %v1796 = vmul.f32 %v1780, 0.5
  %v1797 = vmul.f32 %v1781, 0.5
  %v1798 = vmul.f32 %v1782, 0.5
  %v1799 = vmul.f32 %v1783, 0.5
  %v1800 = vmul.f32 %v1784, 0.5
  %v1801 = vmul.f32 %v1785, 0.5
  %v1802 = vmul.f32 %v1786, 0.5
  %v1803 = vmul.f32 %v1787, 0.5
  %v1804 = vmul.f32 %v1788, 0.5
  %v1805 = vmul.f32 %v1789, 0.5
  %v1806 = vmul.f32 %v1790, 0.5
  %v1807 = vmul.f32 %v1791, 0.5
  %v1808 = vmul.f32 %v1792, 0.5
  %v1809 = vmul.f32 %v1267, %v1793
  %v1810 = vmul.f32 %v1268, %v1794
  %v1811 = vmul.f32 %v1269, %v1795
  %v1812 = vmul.f32 %v1270, %v1796
  %v1813 = vmul.f32 %v1271, %v1797
  %v1814 = vmul.f32 %v1272, %v1798
  %v1815 = vmul.f32 %v1273, %v1799
  %v1816 = vmul.f32 %v1274, %v1800
  %v1817 = vmul.f32 %v1275, %v1801
  %v1818 = vmul.f32 %v1276, %v1802
  %v1819 = vmul.f32 %v1277, %v1803
  %v1820 = vmul.f32 %v1278, %v1804
  %v1821 = vmul.f32 %v1279, %v1805
  %v1822 = vmul.f32 %v1280, %v1806
  %v1823 = vmul.f32 %v1281, %v1807
  %v1824 = vmul.f32 %v1282, %v1808
  %v1826 = vlaneseq
  %v1827 = vshrl.u32 %v1826, 7
  %v1828 = vsub.s32 0, %v1827
  %v1829 = vrot.slane %v119, %v1828
  %v1831 = vadd.f32 %v1809, %v1829
  %v1832 = vadd.f32 %v1810, %v1829
  %v1833 = vadd.f32 %v1811, %v1829
  %v1834 = vadd.f32 %v1812, %v1829
  %v1835 = vadd.f32 %v1813, %v1829
  %v1836 = vadd.f32 %v1814, %v1829
  %v1837 = vadd.f32 %v1815, %v1829
  %v1838 = vadd.f32 %v1816, %v1829
  %v1839 = vadd.f32 %v1817, %v1829
  %v1840 = vadd.f32 %v1818, %v1829
  %v1841 = vadd.f32 %v1819, %v1829
  %v1842 = vadd.f32 %v1820, %v1829
  %v1843 = vadd.f32 %v1821, %v1829
  %v1844 = vadd.f32 %v1822, %v1829
  %v1845 = vadd.f32 %v1823, %v1829
  %v1846 = vadd.f32 %v1824, %v1829
  %1847 = vmax.xlane.f32.xlu0 %v1831
  %v1848 = vpop.xlane.xlu0 %1847
  %1849 = vmax.xlane.f32.xlu0 %v1832
  %v1850 = vpop.xlane.xlu0 %1849
  %1851 = vmax.xlane.f32.xlu0 %v1833
  %v1852 = vpop.xlane.xlu0 %1851
  %1853 = vmax.xlane.f32.xlu0 %v1834
  %v1854 = vpop.xlane.xlu0 %1853
  %1855 = vmax.xlane.f32.xlu0 %v1835
  %v1856 = vpop.xlane.xlu0 %1855
  %1857 = vmax.xlane.f32.xlu0 %v1836
  %v1858 = vpop.xlane.xlu0 %1857
  %1859 = vmax.xlane.f32.xlu0 %v1837
  %v1860 = vpop.xlane.xlu0 %1859
  %1861 = vmax.xlane.f32.xlu0 %v1838
  %v1862 = vpop.xlane.xlu0 %1861
  %1863 = vmax.xlane.f32.xlu0 %v1839
  %v1864 = vpop.xlane.xlu0 %1863
  %1865 = vmax.xlane.f32.xlu0 %v1840
  %v1866 = vpop.xlane.xlu0 %1865
  %1867 = vmax.xlane.f32.xlu0 %v1841
  %v1868 = vpop.xlane.xlu0 %1867
  %1869 = vmax.xlane.f32.xlu0 %v1842
  %v1870 = vpop.xlane.xlu0 %1869
  %1871 = vmax.xlane.f32.xlu0 %v1843
  %v1872 = vpop.xlane.xlu0 %1871
  %1873 = vmax.xlane.f32.xlu0 %v1844
  %v1874 = vpop.xlane.xlu0 %1873
  %1875 = vmax.xlane.f32.xlu0 %v1845
  %v1876 = vpop.xlane.xlu0 %1875
  %1877 = vmax.xlane.f32.xlu0 %v1846
  %v1878 = vpop.xlane.xlu0 %1877
  %v1879 = vsub.f32 %v1831, %v1848
  %v1880 = vsub.f32 %v1832, %v1850
  %v1881 = vsub.f32 %v1833, %v1852
  %v1882 = vsub.f32 %v1834, %v1854
  %v1883 = vsub.f32 %v1835, %v1856
  %v1884 = vsub.f32 %v1836, %v1858
  %v1885 = vsub.f32 %v1837, %v1860
  %v1886 = vsub.f32 %v1838, %v1862
  %v1887 = vsub.f32 %v1839, %v1864
  %v1888 = vsub.f32 %v1840, %v1866
  %v1889 = vsub.f32 %v1841, %v1868
  %v1890 = vsub.f32 %v1842, %v1870
  %v1891 = vsub.f32 %v1843, %v1872
  %v1892 = vsub.f32 %v1844, %v1874
  %v1893 = vsub.f32 %v1845, %v1876
  %v1894 = vsub.f32 %v1846, %v1878
  %v1895 = vmul.f32 %v1879, 1.442695
  %v1896 = vpow.pop %v1895
  %v1897 = vmul.f32 %v1880, 1.442695
  %v1898 = vpow.pop %v1897
  %v1899 = vmul.f32 %v1881, 1.442695
  %v1900 = vpow.pop %v1899
  %v1901 = vmul.f32 %v1882, 1.442695
  %v1902 = vpow.pop %v1901
  %v1903 = vmul.f32 %v1883, 1.442695
  %v1904 = vpow.pop %v1903
  %v1905 = vmul.f32 %v1884, 1.442695
  %v1906 = vpow.pop %v1905
  %v1907 = vmul.f32 %v1885, 1.442695
  %v1908 = vpow.pop %v1907
  %v1909 = vmul.f32 %v1886, 1.442695
  %v1910 = vpow.pop %v1909
  %v1911 = vmul.f32 %v1887, 1.442695
  %v1912 = vpow.pop %v1911
  %v1913 = vmul.f32 %v1888, 1.442695
  %v1914 = vpow.pop %v1913
  %v1915 = vmul.f32 %v1889, 1.442695
  %v1916 = vpow.pop %v1915
  %v1917 = vmul.f32 %v1890, 1.442695
  %v1918 = vpow.pop %v1917
  %v1919 = vmul.f32 %v1891, 1.442695
  %v1920 = vpow.pop %v1919
  %v1921 = vmul.f32 %v1892, 1.442695
  %v1922 = vpow.pop %v1921
  %v1923 = vmul.f32 %v1893, 1.442695
  %v1924 = vpow.pop %v1923
  %v1925 = vmul.f32 %v1894, 1.442695
  %v1926 = vpow.pop %v1925
  %1927 = vadd.xlane.f32.xlu0 %v1896
  %v1928 = vpop.xlane.xlu0 %1927
  %1929 = vadd.xlane.f32.xlu0 %v1898
  %v1930 = vpop.xlane.xlu0 %1929
  %1931 = vadd.xlane.f32.xlu0 %v1900
  %v1932 = vpop.xlane.xlu0 %1931
  %1933 = vadd.xlane.f32.xlu0 %v1902
  %v1934 = vpop.xlane.xlu0 %1933
  %1935 = vadd.xlane.f32.xlu0 %v1904
  %v1936 = vpop.xlane.xlu0 %1935
  %1937 = vadd.xlane.f32.xlu0 %v1906
  %v1938 = vpop.xlane.xlu0 %1937
  %1939 = vadd.xlane.f32.xlu0 %v1908
  %v1940 = vpop.xlane.xlu0 %1939
  %1941 = vadd.xlane.f32.xlu0 %v1910
  %v1942 = vpop.xlane.xlu0 %1941
  %1943 = vadd.xlane.f32.xlu0 %v1912
  %v1944 = vpop.xlane.xlu0 %1943
  %1945 = vadd.xlane.f32.xlu0 %v1914
  %v1946 = vpop.xlane.xlu0 %1945
  %1947 = vadd.xlane.f32.xlu0 %v1916
  %v1948 = vpop.xlane.xlu0 %1947
  %1949 = vadd.xlane.f32.xlu0 %v1918
  %v1950 = vpop.xlane.xlu0 %1949
  %1951 = vadd.xlane.f32.xlu0 %v1920
  %v1952 = vpop.xlane.xlu0 %1951
  %1953 = vadd.xlane.f32.xlu0 %v1922
  %v1954 = vpop.xlane.xlu0 %1953
  %1955 = vadd.xlane.f32.xlu0 %v1924
  %v1956 = vpop.xlane.xlu0 %1955
  %1957 = vadd.xlane.f32.xlu0 %v1926
  %v1958 = vpop.xlane.xlu0 %1957
  %v1959 = vrcp.pop %v1928
  %v1960 = vrcp.pop %v1930
  %v1961 = vrcp.pop %v1932
  %v1962 = vrcp.pop %v1934
  %v1963 = vrcp.pop %v1936
  %v1964 = vrcp.pop %v1938
  %v1965 = vrcp.pop %v1940
  %v1966 = vrcp.pop %v1942
  %v1967 = vrcp.pop %v1944
  %v1968 = vrcp.pop %v1946
  %v1969 = vrcp.pop %v1948
  %v1970 = vrcp.pop %v1950
  %v1971 = vrcp.pop %v1952
  %v1972 = vrcp.pop %v1954
  %v1973 = vrcp.pop %v1956
  %v1974 = vrcp.pop %v1958
  %v1975 = vmul.f32 %v1896, %v1959
  %v1976 = vmul.f32 %v1898, %v1960
  %v1977 = vmul.f32 %v1900, %v1961
  %v1978 = vmul.f32 %v1902, %v1962
  %v1979 = vmul.f32 %v1904, %v1963
  %v1980 = vmul.f32 %v1906, %v1964
  %v1981 = vmul.f32 %v1908, %v1965
  %v1982 = vmul.f32 %v1910, %v1966
  %v1983 = vmul.f32 %v1912, %v1967
  %v1984 = vmul.f32 %v1914, %v1968
  %v1985 = vmul.f32 %v1916, %v1969
  %v1986 = vmul.f32 %v1918, %v1970
  %v1987 = vmul.f32 %v1920, %v1971
  %v1988 = vmul.f32 %v1922, %v1972
  %v1989 = vmul.f32 %v1924, %v1973
  %v1990 = vmul.f32 %v1926, %v1974
  %1991 = vxpose.xlu0.b32.start [1/16] %v1975, 128
  %1992 = vxpose.xlu0.b32.cont [2/16] %v1976, 128
  %1993 = vxpose.xlu0.b32.cont [3/16] %v1977, 128
  %1994 = vxpose.xlu0.b32.cont [4/16] %v1978, 128
  %1995 = vxpose.xlu0.b32.cont [5/16] %v1979, 128
  %1996 = vxpose.xlu0.b32.cont [6/16] %v1980, 128
  %1997 = vxpose.xlu0.b32.cont [7/16] %v1981, 128
  %1998 = vxpose.xlu0.b32.cont [8/16] %v1982, 128
  %1999 = vxpose.xlu0.b32.cont [9/16] %v1983, 128
  %2000 = vxpose.xlu0.b32.cont [10/16] %v1984, 128
  %2001 = vxpose.xlu0.b32.cont [11/16] %v1985, 128
  %2002 = vxpose.xlu0.b32.cont [12/16] %v1986, 128
  %2003 = vxpose.xlu0.b32.cont [13/16] %v1987, 128
  %2004 = vxpose.xlu0.b32.cont [14/16] %v1988, 128
  %2005 = vxpose.xlu0.b32.cont [15/16] %v1989, 128
  %2006 = vxpose.xlu0.b32.end [16/16] %v1990, 128
  %v2007 = vpop.trf.xlu0
  %v2008 = vpop.trf.xlu0
  %v2009 = vpop.trf.xlu0
  %v2010 = vpop.trf.xlu0
  %v2011 = vpop.trf.xlu0
  %v2012 = vpop.trf.xlu0
  %v2013 = vpop.trf.xlu0
  %v2014 = vpop.trf.xlu0
  %v2015 = vpop.trf.xlu0
  %v2016 = vpop.trf.xlu0
  %v2017 = vpop.trf.xlu0
  %v2018 = vpop.trf.xlu0
  %v2019 = vpop.trf.xlu0
  %v2020 = vpop.trf.xlu0
  %v2021 = vpop.trf.xlu0
  %v2022 = vpop.trf.xlu0
  %2023 = vst [vmem:[%s4] sm:$0xff] %v2007
  %2024 = vst [vmem:[%s4 + $0x8] sm:$0xff] %v2008
  // Predicated region
  $region18: #{adaptive_configuration_forward.1} parent=0 // pred_check
    _
  $region19: #{adaptive_configuration_forward.1} parent=0 // pred_check_branch
    %2026 = sbr.rel (0) target = $region21
  $region20: #{adaptive_configuration_forward.1} parent=0 // pred_region
    _
  $region21: #{adaptive_configuration_forward.1} parent=0 // pred_fallthru
    _
  // Predicated region
  $region22: #{adaptive_configuration_forward.1} parent=0 // pred_check
    _
  $region23: #{adaptive_configuration_forward.1} parent=0 // pred_check_branch
    %2028 = sbr.rel (0) target = $region25
  $region24: #{adaptive_configuration_forward.1} parent=0 // pred_region
    _
  $region25: #{adaptive_configuration_forward.1} parent=0 // pred_fallthru
    _

</llo_original>
